<compile_context>
chip_gen: v6e
topology: v6e:2x2x1
jax: 0.10.0
libtpu: 0.0.40
codegen_flags: <defaults>
</compile_context>

<pallas_src>
import jax
import jax.numpy as jnp
from jax import lax
from jax.experimental import pallas as pl
from jax.experimental.pallas import tpu as pltpu

# ---- small synthetic config (structure of mpnet-base, tiny sizes) ----------
B = 2          # batch
S = 8          # sequence length (== f32 sublane count -> aligned row slices)
H = 32         # hidden size
NH = 2         # attention heads
DH = H // NH   # head dim
FF = 64        # intermediate (FFN) size
V = 100        # vocab size
L = 2          # encoder layers
EPS = 1e-5


# ----------------------------- fused kernel ---------------------------------
def _layernorm(h, g, b):
    mu = jnp.mean(h, axis=-1, keepdims=True)
    var = jnp.mean((h - mu) ** 2, axis=-1, keepdims=True)
    return (h - mu) * lax.rsqrt(var + EPS) * g + b


def _encoder_kernel(x_ref, mask_ref, emb_g_ref, emb_b_ref,
                    wqkv_ref, bqkv_ref, wo_ref, bo_ref,
                    ln1g_ref, ln1b_ref, w1_ref, b1_ref,
                    w2_ref, b2_ref, ln2g_ref, ln2b_ref,
                    wp_ref, bp_ref, out_ref):
    """Whole encoder forward for the whole batch in one invocation.

    x_ref:    (B*S, H)  token embeddings (word + position), f32
    mask_ref: (B, S)    additive attention mask (-1e9 on padded positions)
    out_ref:  (B, H)    pooler outputs (lane/sublane-dense single store)
    Per-layer weights are stacked along a leading L axis (VMEM resident).
    """
    x = _layernorm(x_ref[...], emb_g_ref[...], emb_b_ref[...])      # (B*S, H)
    mask = mask_ref[...]                                             # (B, S)
    mask_rows = [mask[b:b + 1, :] for b in range(B)]                 # (1, S)

    # Head lane-masks: head h owns lanes [h*DH, (h+1)*DH).  Built ONCE and
    # reused across all layers / sequences (JAX does not CSE iota broadcasts).
    col = lax.broadcasted_iota(jnp.int32, (1, H), 1)                 # (1, H)
    hms = [((col >= h * DH) & (col < (h + 1) * DH)).astype(jnp.float32)
           for h in range(NH)]

    for l in range(L):                                # static unroll (L small)
        # ---- fused QKV projection, batch-wide (scale folded into W_q) ------
        qkv = jnp.dot(x, wqkv_ref[l],
                      preferred_element_type=jnp.float32) + bqkv_ref[l]
        q = qkv[:, 0:H]
        k = qkv[:, H:2 * H]
        v = qkv[:, 2 * H:3 * H]

        # ---- per-sequence attention with sublane-stacked heads -------------
        ctx_rows = []
        for b in range(B):                            # static, B small
            r0 = b * S                                # sublane-aligned (S=8)
            qb = q[r0:r0 + S, :]                      # (S, H)
            kb = k[r0:r0 + S, :]
            vb = v[r0:r0 + S, :]

            # Stack head-masked q blocks along sublanes: (NH*S, H).
            # Contracting over full H against UNMASKED k gives the per-head
            # scores in each S-row block (masked lanes contribute 0).
            q_stk = jnp.concatenate([qb * hms[h] for h in range(NH)], axis=0)
            s = lax.dot_general(q_stk, kb, (((1,), (1,)), ((), ())),
                                preferred_element_type=jnp.float32)  # (NH*S,S)
            s = s + mask_rows[b]
            s = s - jnp.max(s, axis=-1, keepdims=True)
            p = jnp.exp(s)
            p = p * pl.reciprocal(jnp.sum(p, axis=-1, keepdims=True),
                                  approx=True)        # EUP vrcp slot

            # One matmul against UNMASKED v; row block h holds P_h @ V, and
            # only head h's lane block of it is valid -> merge by lane-masking
            # the S-row blocks and adding.
            c_stk = jnp.dot(p, vb, preferred_element_type=jnp.float32)
            cb = c_stk[0:S, :] * hms[0]
            for h in range(1, NH):
                cb = cb + c_stk[h * S:(h + 1) * S, :] * hms[h]
            ctx_rows.append(cb)
        ctx = jnp.concatenate(ctx_rows, axis=0)                      # (B*S, H)

        attn = jnp.dot(ctx, wo_ref[l],
                       preferred_element_type=jnp.float32) + bo_ref[l]
        x = _layernorm(attn + x, ln1g_ref[l], ln1b_ref[l])

        # ---- feed-forward, batch-wide ---------------------------------------
        ff = jnp.dot(x, w1_ref[l],
                     preferred_element_type=jnp.float32) + b1_ref[l]
        ff = jax.nn.gelu(ff)
        ff = jnp.dot(ff, w2_ref[l],
                     preferred_element_type=jnp.float32) + b2_ref[l]
        x = _layernorm(ff + x, ln2g_ref[l], ln2b_ref[l])

    # ---- pooler: tanh(W_p @ hidden[:, 0] + b_p) on the CLS rows --------------
    cls = jnp.concatenate([x[b * S:b * S + 1, :] for b in range(B)], axis=0)
    out_ref[...] = jnp.tanh(
        jnp.dot(cls, wp_ref[...], preferred_element_type=jnp.float32)
        + bp_ref[...])                                               # (B, H)


def encoder_forward(x_emb, mask_add, packed):
    """x_emb: (B*S, H) f32, mask_add: (B, S) f32, packed: stacked weights."""
    vmem_spec = pl.BlockSpec(memory_space=pltpu.MemorySpace.VMEM)
    n_inputs = 2 + len(packed)
    # Single invocation, no grid: everything is VMEM resident (< 100 KiB),
    # no per-step pipeline prologue, no double-buffering of the 16 weight
    # operands, one lane-dense (B, H) output store.
    return pl.pallas_call(
        _encoder_kernel,
        out_shape=jax.ShapeDtypeStruct((B, H), jnp.float32),
        in_specs=[vmem_spec] * n_inputs,
        out_specs=vmem_spec,
    )(x_emb, mask_add, *packed)


# ----------------------------- parameters ------------------------------------
def init_params(key):
    def nrm(k, shape):
        return jax.random.normal(k, shape, jnp.float32) * 0.02

    keys = iter(jax.random.split(key, 8 + 12 * L))
    params = {
        "word_emb": nrm(next(keys), (V, H)),
        "pos_emb": nrm(next(keys), (S, H)),
        "emb_ln_g": jnp.ones((H,), jnp.float32),
        "emb_ln_b": jnp.zeros((H,), jnp.float32),
        "wp": nrm(next(keys), (H, H)),
        "bp": jnp.zeros((H,), jnp.float32),
        "layers": [],
    }
    for _ in range(L):
        lp = {
            "wq": nrm(next(keys), (H, H)), "bq": jnp.zeros((H,), jnp.float32),
            "wk": nrm(next(keys), (H, H)), "bk": jnp.zeros((H,), jnp.float32),
            "wv": nrm(next(keys), (H, H)), "bv": jnp.zeros((H,), jnp.float32),
            "wo": nrm(next(keys), (H, H)), "bo": jnp.zeros((H,), jnp.float32),
            "ln1_g": jnp.ones((H,), jnp.float32),
            "ln1_b": jnp.zeros((H,), jnp.float32),
            "w1": nrm(next(keys), (H, FF)), "b1": jnp.zeros((FF,), jnp.float32),
            "w2": nrm(next(keys), (FF, H)), "b2": jnp.zeros((H,), jnp.float32),
            "ln2_g": jnp.ones((H,), jnp.float32),
            "ln2_b": jnp.zeros((H,), jnp.float32),
        }
        params["layers"].append(lp)
    return params


def pack_params(p):
    """Stack per-layer weights to (L, ...) arrays; fuse QKV; fold in the
    attention scale; pre-reshape all biases/LN params to 2-D rows."""
    scale = 1.0 / (DH ** 0.5)
    layers = p["layers"]
    stk = lambda f: jnp.stack([f(lp) for lp in layers])

    wqkv = stk(lambda lp: jnp.concatenate(
        [lp["wq"] * scale, lp["wk"], lp["wv"]], axis=1))             # (L,H,3H)
    bqkv = stk(lambda lp: jnp.concatenate(
        [lp["bq"] * scale, lp["bk"], lp["bv"]])[None, :])            # (L,1,3H)
    wo = stk(lambda lp: lp["wo"])
    bo = stk(lambda lp: lp["bo"][None, :])
    ln1g = stk(lambda lp: lp["ln1_g"][None, :])
    ln1b = stk(lambda lp: lp["ln1_b"][None, :])
    w1 = stk(lambda lp: lp["w1"])
    b1 = stk(lambda lp: lp["b1"][None, :])
    w2 = stk(lambda lp: lp["w2"])
    b2 = stk(lambda lp: lp["b2"][None, :])
    ln2g = stk(lambda lp: lp["ln2_g"][None, :])
    ln2b = stk(lambda lp: lp["ln2_b"][None, :])

    return (p["emb_ln_g"][None, :], p["emb_ln_b"][None, :],
            wqkv, bqkv, wo, bo, ln1g, ln1b, w1, b1, w2, b2, ln2g, ln2b,
            p["wp"], p["bp"][None, :])


# ------------------------------ forward ---------------------------------------
def forward(params, input_ids, attention_mask):
    # embedding gather + position add is JAX glue; everything else is in-kernel
    x = params["word_emb"][input_ids] + params["pos_emb"][None]
    x = x.reshape(B * S, H).astype(jnp.float32)
    mask_add = ((1.0 - attention_mask.astype(jnp.float32)) * -1e9
                ).reshape(B, S)
    packed = pack_params(params)
    return forward_packed(x, mask_add, packed)


@jax.jit
def forward_packed(x, mask_add, packed):
    return encoder_forward(x, mask_add, packed)


# ------------------------------- main ------------------------------------------
if __name__ == "__main__":
    key = jax.random.PRNGKey(0)
    pkey, ikey = jax.random.split(key)
    params = init_params(pkey)

    input_ids = jax.random.randint(ikey, (B, S), 0, V, dtype=jnp.int32)
    attention_mask = jnp.ones((B, S), dtype=jnp.int32)

    pooled = forward(params, input_ids, attention_mask)
    pooled = jax.block_until_ready(pooled)

    assert pooled.shape == (B, H)
    assert bool(jnp.all(jnp.isfinite(pooled)))
    print("KERNEL_OK")
</pallas_src>

<mosaic_0001>
module attributes {stable_mosaic.version = 11 : i64} {
  func.func @_encoder_kernel(%arg0: memref<16x32xf32, #tpu.memory_space<vmem>>, %arg1: memref<2x8xf32, #tpu.memory_space<vmem>>, %arg2: memref<1x32xf32, #tpu.memory_space<vmem>>, %arg3: memref<1x32xf32, #tpu.memory_space<vmem>>, %arg4: memref<2x32x96xf32, #tpu.memory_space<vmem>>, %arg5: memref<2x1x96xf32, #tpu.memory_space<vmem>>, %arg6: memref<2x32x32xf32, #tpu.memory_space<vmem>>, %arg7: memref<2x1x32xf32, #tpu.memory_space<vmem>>, %arg8: memref<2x1x32xf32, #tpu.memory_space<vmem>>, %arg9: memref<2x1x32xf32, #tpu.memory_space<vmem>>, %arg10: memref<2x32x64xf32, #tpu.memory_space<vmem>>, %arg11: memref<2x1x64xf32, #tpu.memory_space<vmem>>, %arg12: memref<2x64x32xf32, #tpu.memory_space<vmem>>, %arg13: memref<2x1x32xf32, #tpu.memory_space<vmem>>, %arg14: memref<2x1x32xf32, #tpu.memory_space<vmem>>, %arg15: memref<2x1x32xf32, #tpu.memory_space<vmem>>, %arg16: memref<32x32xf32, #tpu.memory_space<vmem>>, %arg17: memref<1x32xf32, #tpu.memory_space<vmem>>, %arg18: memref<2x32xf32, #tpu.memory_space<vmem>>) attributes {dimension_semantics = [], scalar_prefetch = 0 : i64, scratch_operands = 0 : i64, tpu.core_type = #tpu.core_type<tc>} {
    %c0 = arith.constant 0 : index
    %c0_0 = arith.constant 0 : index
    %0 = vector.load %arg0[%c0, %c0_0] : memref<16x32xf32, #tpu.memory_space<vmem>>, vector<16x32xf32>
    %c0_1 = arith.constant 0 : index
    %c0_2 = arith.constant 0 : index
    %1 = vector.load %arg2[%c0_1, %c0_2] : memref<1x32xf32, #tpu.memory_space<vmem>>, vector<1x32xf32>
    %c0_3 = arith.constant 0 : index
    %c0_4 = arith.constant 0 : index
    %2 = vector.load %arg3[%c0_3, %c0_4] : memref<1x32xf32, #tpu.memory_space<vmem>>, vector<1x32xf32>
    %cst = arith.constant dense<0.000000e+00> : vector<16xf32>
    %3 = vector.multi_reduction <add>, %0, %cst [1] : vector<16x32xf32> to vector<16xf32>
    %4 = vector.shape_cast %3 : vector<16xf32> to vector<16x1xf32>
    %cst_5 = arith.constant 3.200000e+01 : f32
    %5 = vector.broadcast %cst_5 : f32 to vector<16x1xf32>
    %6 = arith.divf %4, %5 : vector<16x1xf32>
    %7 = vector.broadcast %6 : vector<16x1xf32> to vector<16x32xf32>
    %8 = arith.subf %0, %7 : vector<16x32xf32>
    %9 = arith.mulf %8, %8 : vector<16x32xf32>
    %cst_6 = arith.constant dense<0.000000e+00> : vector<16xf32>
    %10 = vector.multi_reduction <add>, %9, %cst_6 [1] : vector<16x32xf32> to vector<16xf32>
    %11 = vector.shape_cast %10 : vector<16xf32> to vector<16x1xf32>
    %cst_7 = arith.constant 3.200000e+01 : f32
    %12 = vector.broadcast %cst_7 : f32 to vector<16x1xf32>
    %13 = arith.divf %11, %12 : vector<16x1xf32>
    %14 = vector.broadcast %6 : vector<16x1xf32> to vector<16x32xf32>
    %15 = arith.subf %0, %14 : vector<16x32xf32>
    %cst_8 = arith.constant 9.99999974E-6 : f32
    %16 = vector.broadcast %cst_8 : f32 to vector<16x1xf32>
    %17 = arith.addf %13, %16 : vector<16x1xf32>
    %18 = math.rsqrt %17 : vector<16x1xf32>
    %19 = vector.broadcast %18 : vector<16x1xf32> to vector<16x32xf32>
    %20 = arith.mulf %15, %19 : vector<16x32xf32>
    %21 = vector.broadcast %1 : vector<1x32xf32> to vector<16x32xf32>
    %22 = arith.mulf %20, %21 : vector<16x32xf32>
    %23 = vector.broadcast %2 : vector<1x32xf32> to vector<16x32xf32>
    %24 = arith.addf %22, %23 : vector<16x32xf32>
    %c0_9 = arith.constant 0 : index
    %c0_10 = arith.constant 0 : index
    %25 = vector.load %arg1[%c0_9, %c0_10] : memref<2x8xf32, #tpu.memory_space<vmem>>, vector<2x8xf32>
    %26 = vector.extract_strided_slice %25 {offsets = [0, 0], sizes = [1, 8], strides = [1, 1]} : vector<2x8xf32> to vector<1x8xf32>
    %27 = vector.extract_strided_slice %25 {offsets = [1, 0], sizes = [1, 8], strides = [1, 1]} : vector<2x8xf32> to vector<1x8xf32>
    %28 = tpu.iota {dimensions = array<i32: 1>} : vector<1x32xi32>
    %c0_i32 = arith.constant 0 : i32
    %29 = vector.broadcast %c0_i32 : i32 to vector<1x32xi32>
    %30 = arith.cmpi sge, %28, %29 : vector<1x32xi32>
    %c16_i32 = arith.constant 16 : i32
    %31 = vector.broadcast %c16_i32 : i32 to vector<1x32xi32>
    %32 = arith.cmpi slt, %28, %31 : vector<1x32xi32>
    %33 = arith.andi %30, %32 : vector<1x32xi1>
    %34 = arith.extui %33 : vector<1x32xi1> to vector<1x32xi32>
    %35 = arith.sitofp %34 : vector<1x32xi32> to vector<1x32xf32>
    %c16_i32_11 = arith.constant 16 : i32
    %36 = vector.broadcast %c16_i32_11 : i32 to vector<1x32xi32>
    %37 = arith.cmpi sge, %28, %36 : vector<1x32xi32>
    %c32_i32 = arith.constant 32 : i32
    %38 = vector.broadcast %c32_i32 : i32 to vector<1x32xi32>
    %39 = arith.cmpi slt, %28, %38 : vector<1x32xi32>
    %40 = arith.andi %37, %39 : vector<1x32xi1>
    %41 = arith.extui %40 : vector<1x32xi1> to vector<1x32xi32>
    %42 = arith.sitofp %41 : vector<1x32xi32> to vector<1x32xf32>
    %c0_12 = arith.constant 0 : index
    %c0_13 = arith.constant 0 : index
    %c0_14 = arith.constant 0 : index
    %43 = vector.load %arg4[%c0_12, %c0_13, %c0_14] : memref<2x32x96xf32, #tpu.memory_space<vmem>>, vector<1x32x96xf32>
    %44 = vector.shape_cast %43 : vector<1x32x96xf32> to vector<32x96xf32>
    %cst_15 = arith.constant dense<0.000000e+00> : vector<16x96xf32>
    %45 = tpu.matmul %24, %44, %cst_15 {dimension_numbers = #tpu.dot_dimension_numbers<[1], [0], [0], [1], [0, 0, 1, 1], [], []>} : vector<16x32xf32>, vector<32x96xf32>, vector<16x96xf32> -> vector<16x96xf32>
    %c0_16 = arith.constant 0 : index
    %c0_17 = arith.constant 0 : index
    %c0_18 = arith.constant 0 : index
    %46 = vector.load %arg5[%c0_16, %c0_17, %c0_18] : memref<2x1x96xf32, #tpu.memory_space<vmem>>, vector<1x1x96xf32>
    %47 = vector.shape_cast %46 : vector<1x1x96xf32> to vector<1x96xf32>
    %48 = vector.broadcast %47 : vector<1x96xf32> to vector<16x96xf32>
    %49 = arith.addf %45, %48 : vector<16x96xf32>
    %50 = vector.extract_strided_slice %49 {offsets = [0, 0], sizes = [16, 32], strides = [1, 1]} : vector<16x96xf32> to vector<16x32xf32>
    %51 = vector.extract_strided_slice %49 {offsets = [0, 32], sizes = [16, 32], strides = [1, 1]} : vector<16x96xf32> to vector<16x32xf32>
    %52 = vector.extract_strided_slice %49 {offsets = [0, 64], sizes = [16, 32], strides = [1, 1]} : vector<16x96xf32> to vector<16x32xf32>
    %53 = vector.extract_strided_slice %50 {offsets = [0, 0], sizes = [8, 32], strides = [1, 1]} : vector<16x32xf32> to vector<8x32xf32>
    %54 = vector.extract_strided_slice %51 {offsets = [0, 0], sizes = [8, 32], strides = [1, 1]} : vector<16x32xf32> to vector<8x32xf32>
    %55 = vector.extract_strided_slice %52 {offsets = [0, 0], sizes = [8, 32], strides = [1, 1]} : vector<16x32xf32> to vector<8x32xf32>
    %56 = vector.broadcast %35 : vector<1x32xf32> to vector<8x32xf32>
    %57 = arith.mulf %53, %56 : vector<8x32xf32>
    %58 = vector.broadcast %42 : vector<1x32xf32> to vector<8x32xf32>
    %59 = arith.mulf %53, %58 : vector<8x32xf32>
    %60 = tpu.concatenate %57, %59 in 0 : vector<8x32xf32>, vector<8x32xf32> -> vector<16x32xf32>
    %cst_19 = arith.constant dense<0.000000e+00> : vector<16x8xf32>
    %61 = tpu.matmul %60, %54, %cst_19 {dimension_numbers = #tpu.dot_dimension_numbers<[1], [1], [0], [0], [0, 0, 1, 0], [], []>} : vector<16x32xf32>, vector<8x32xf32>, vector<16x8xf32> -> vector<16x8xf32>
    %62 = vector.broadcast %26 : vector<1x8xf32> to vector<16x8xf32>
    %63 = arith.addf %61, %62 : vector<16x8xf32>
    %cst_20 = arith.constant dense<0xFF800000> : vector<16xf32>
    %64 = vector.multi_reduction <maximumf>, %63, %cst_20 [1] : vector<16x8xf32> to vector<16xf32>
    %65 = vector.shape_cast %64 : vector<16xf32> to vector<16x1xf32>
    %66 = vector.broadcast %65 : vector<16x1xf32> to vector<16x8xf32>
    %67 = arith.subf %63, %66 : vector<16x8xf32>
    %68 = math.exp %67 : vector<16x8xf32>
    %cst_21 = arith.constant dense<0.000000e+00> : vector<16xf32>
    %69 = vector.multi_reduction <add>, %68, %cst_21 [1] : vector<16x8xf32> to vector<16xf32>
    %70 = vector.shape_cast %69 : vector<16xf32> to vector<16x1xf32>
    %71 = tpu.reciprocal %70 {approx = true} : vector<16x1xf32> -> vector<16x1xf32>
    %72 = vector.broadcast %71 : vector<16x1xf32> to vector<16x8xf32>
    %73 = arith.mulf %68, %72 : vector<16x8xf32>
    %cst_22 = arith.constant dense<0.000000e+00> : vector<16x32xf32>
    %74 = tpu.matmul %73, %55, %cst_22 {dimension_numbers = #tpu.dot_dimension_numbers<[1], [0], [0], [1], [0, 0, 1, 1], [], []>} : vector<16x8xf32>, vector<8x32xf32>, vector<16x32xf32> -> vector<16x32xf32>
    %75 = vector.extract_strided_slice %74 {offsets = [0, 0], sizes = [8, 32], strides = [1, 1]} : vector<16x32xf32> to vector<8x32xf32>
    %76 = vector.broadcast %35 : vector<1x32xf32> to vector<8x32xf32>
    %77 = arith.mulf %75, %76 : vector<8x32xf32>
    %78 = vector.extract_strided_slice %74 {offsets = [8, 0], sizes = [8, 32], strides = [1, 1]} : vector<16x32xf32> to vector<8x32xf32>
    %79 = vector.broadcast %42 : vector<1x32xf32> to vector<8x32xf32>
    %80 = arith.mulf %78, %79 : vector<8x32xf32>
    %81 = arith.addf %77, %80 : vector<8x32xf32>
    %82 = vector.extract_strided_slice %50 {offsets = [8, 0], sizes = [8, 32], strides = [1, 1]} : vector<16x32xf32> to vector<8x32xf32>
    %83 = vector.extract_strided_slice %51 {offsets = [8, 0], sizes = [8, 32], strides = [1, 1]} : vector<16x32xf32> to vector<8x32xf32>
    %84 = vector.extract_strided_slice %52 {offsets = [8, 0], sizes = [8, 32], strides = [1, 1]} : vector<16x32xf32> to vector<8x32xf32>
    %85 = vector.broadcast %35 : vector<1x32xf32> to vector<8x32xf32>
    %86 = arith.mulf %82, %85 : vector<8x32xf32>
    %87 = vector.broadcast %42 : vector<1x32xf32> to vector<8x32xf32>
    %88 = arith.mulf %82, %87 : vector<8x32xf32>
    %89 = tpu.concatenate %86, %88 in 0 : vector<8x32xf32>, vector<8x32xf32> -> vector<16x32xf32>
    %cst_23 = arith.constant dense<0.000000e+00> : vector<16x8xf32>
    %90 = tpu.matmul %89, %83, %cst_23 {dimension_numbers = #tpu.dot_dimension_numbers<[1], [1], [0], [0], [0, 0, 1, 0], [], []>} : vector<16x32xf32>, vector<8x32xf32>, vector<16x8xf32> -> vector<16x8xf32>
    %91 = vector.broadcast %27 : vector<1x8xf32> to vector<16x8xf32>
    %92 = arith.addf %90, %91 : vector<16x8xf32>
    %cst_24 = arith.constant dense<0xFF800000> : vector<16xf32>
    %93 = vector.multi_reduction <maximumf>, %92, %cst_24 [1] : vector<16x8xf32> to vector<16xf32>
    %94 = vector.shape_cast %93 : vector<16xf32> to vector<16x1xf32>
    %95 = vector.broadcast %94 : vector<16x1xf32> to vector<16x8xf32>
    %96 = arith.subf %92, %95 : vector<16x8xf32>
    %97 = math.exp %96 : vector<16x8xf32>
    %cst_25 = arith.constant dense<0.000000e+00> : vector<16xf32>
    %98 = vector.multi_reduction <add>, %97, %cst_25 [1] : vector<16x8xf32> to vector<16xf32>
    %99 = vector.shape_cast %98 : vector<16xf32> to vector<16x1xf32>
    %100 = tpu.reciprocal %99 {approx = true} : vector<16x1xf32> -> vector<16x1xf32>
    %101 = vector.broadcast %100 : vector<16x1xf32> to vector<16x8xf32>
    %102 = arith.mulf %97, %101 : vector<16x8xf32>
    %cst_26 = arith.constant dense<0.000000e+00> : vector<16x32xf32>
    %103 = tpu.matmul %102, %84, %cst_26 {dimension_numbers = #tpu.dot_dimension_numbers<[1], [0], [0], [1], [0, 0, 1, 1], [], []>} : vector<16x8xf32>, vector<8x32xf32>, vector<16x32xf32> -> vector<16x32xf32>
    %104 = vector.extract_strided_slice %103 {offsets = [0, 0], sizes = [8, 32], strides = [1, 1]} : vector<16x32xf32> to vector<8x32xf32>
    %105 = vector.broadcast %35 : vector<1x32xf32> to vector<8x32xf32>
    %106 = arith.mulf %104, %105 : vector<8x32xf32>
    %107 = vector.extract_strided_slice %103 {offsets = [8, 0], sizes = [8, 32], strides = [1, 1]} : vector<16x32xf32> to vector<8x32xf32>
    %108 = vector.broadcast %42 : vector<1x32xf32> to vector<8x32xf32>
    %109 = arith.mulf %107, %108 : vector<8x32xf32>
    %110 = arith.addf %106, %109 : vector<8x32xf32>
    %111 = tpu.concatenate %81, %110 in 0 : vector<8x32xf32>, vector<8x32xf32> -> vector<16x32xf32>
    %c0_27 = arith.constant 0 : index
    %c0_28 = arith.constant 0 : index
    %c0_29 = arith.constant 0 : index
    %112 = vector.load %arg6[%c0_27, %c0_28, %c0_29] : memref<2x32x32xf32, #tpu.memory_space<vmem>>, vector<1x32x32xf32>
    %113 = vector.shape_cast %112 : vector<1x32x32xf32> to vector<32x32xf32>
    %cst_30 = arith.constant dense<0.000000e+00> : vector<16x32xf32>
    %114 = tpu.matmul %111, %113, %cst_30 {dimension_numbers = #tpu.dot_dimension_numbers<[1], [0], [0], [1], [0, 0, 1, 1], [], []>} : vector<16x32xf32>, vector<32x32xf32>, vector<16x32xf32> -> vector<16x32xf32>
    %c0_31 = arith.constant 0 : index
    %c0_32 = arith.constant 0 : index
    %c0_33 = arith.constant 0 : index
    %115 = vector.load %arg7[%c0_31, %c0_32, %c0_33] : memref<2x1x32xf32, #tpu.memory_space<vmem>>, vector<1x1x32xf32>
    %116 = vector.shape_cast %115 : vector<1x1x32xf32> to vector<1x32xf32>
    %117 = vector.broadcast %116 : vector<1x32xf32> to vector<16x32xf32>
    %118 = arith.addf %114, %117 : vector<16x32xf32>
    %119 = arith.addf %118, %24 : vector<16x32xf32>
    %c0_34 = arith.constant 0 : index
    %c0_35 = arith.constant 0 : index
    %c0_36 = arith.constant 0 : index
    %120 = vector.load %arg8[%c0_34, %c0_35, %c0_36] : memref<2x1x32xf32, #tpu.memory_space<vmem>>, vector<1x1x32xf32>
    %121 = vector.shape_cast %120 : vector<1x1x32xf32> to vector<1x32xf32>
    %c0_37 = arith.constant 0 : index
    %c0_38 = arith.constant 0 : index
    %c0_39 = arith.constant 0 : index
    %122 = vector.load %arg9[%c0_37, %c0_38, %c0_39] : memref<2x1x32xf32, #tpu.memory_space<vmem>>, vector<1x1x32xf32>
    %123 = vector.shape_cast %122 : vector<1x1x32xf32> to vector<1x32xf32>
    %cst_40 = arith.constant dense<0.000000e+00> : vector<16xf32>
    %124 = vector.multi_reduction <add>, %119, %cst_40 [1] : vector<16x32xf32> to vector<16xf32>
    %125 = vector.shape_cast %124 : vector<16xf32> to vector<16x1xf32>
    %cst_41 = arith.constant 3.200000e+01 : f32
    %126 = vector.broadcast %cst_41 : f32 to vector<16x1xf32>
    %127 = arith.divf %125, %126 : vector<16x1xf32>
    %128 = vector.broadcast %127 : vector<16x1xf32> to vector<16x32xf32>
    %129 = arith.subf %119, %128 : vector<16x32xf32>
    %130 = arith.mulf %129, %129 : vector<16x32xf32>
    %cst_42 = arith.constant dense<0.000000e+00> : vector<16xf32>
    %131 = vector.multi_reduction <add>, %130, %cst_42 [1] : vector<16x32xf32> to vector<16xf32>
    %132 = vector.shape_cast %131 : vector<16xf32> to vector<16x1xf32>
    %cst_43 = arith.constant 3.200000e+01 : f32
    %133 = vector.broadcast %cst_43 : f32 to vector<16x1xf32>
    %134 = arith.divf %132, %133 : vector<16x1xf32>
    %135 = vector.broadcast %127 : vector<16x1xf32> to vector<16x32xf32>
    %136 = arith.subf %119, %135 : vector<16x32xf32>
    %cst_44 = arith.constant 9.99999974E-6 : f32
    %137 = vector.broadcast %cst_44 : f32 to vector<16x1xf32>
    %138 = arith.addf %134, %137 : vector<16x1xf32>
    %139 = math.rsqrt %138 : vector<16x1xf32>
    %140 = vector.broadcast %139 : vector<16x1xf32> to vector<16x32xf32>
    %141 = arith.mulf %136, %140 : vector<16x32xf32>
    %142 = vector.broadcast %121 : vector<1x32xf32> to vector<16x32xf32>
    %143 = arith.mulf %141, %142 : vector<16x32xf32>
    %144 = vector.broadcast %123 : vector<1x32xf32> to vector<16x32xf32>
    %145 = arith.addf %143, %144 : vector<16x32xf32>
    %c0_45 = arith.constant 0 : index
    %c0_46 = arith.constant 0 : index
    %c0_47 = arith.constant 0 : index
    %146 = vector.load %arg10[%c0_45, %c0_46, %c0_47] : memref<2x32x64xf32, #tpu.memory_space<vmem>>, vector<1x32x64xf32>
    %147 = vector.shape_cast %146 : vector<1x32x64xf32> to vector<32x64xf32>
    %cst_48 = arith.constant dense<0.000000e+00> : vector<16x64xf32>
    %148 = tpu.matmul %145, %147, %cst_48 {dimension_numbers = #tpu.dot_dimension_numbers<[1], [0], [0], [1], [0, 0, 1, 1], [], []>} : vector<16x32xf32>, vector<32x64xf32>, vector<16x64xf32> -> vector<16x64xf32>
    %c0_49 = arith.constant 0 : index
    %c0_50 = arith.constant 0 : index
    %c0_51 = arith.constant 0 : index
    %149 = vector.load %arg11[%c0_49, %c0_50, %c0_51] : memref<2x1x64xf32, #tpu.memory_space<vmem>>, vector<1x1x64xf32>
    %150 = vector.shape_cast %149 : vector<1x1x64xf32> to vector<1x64xf32>
    %151 = vector.broadcast %150 : vector<1x64xf32> to vector<16x64xf32>
    %152 = arith.addf %148, %151 : vector<16x64xf32>
    %153 = arith.mulf %152, %152 : vector<16x64xf32>
    %154 = arith.mulf %152, %153 : vector<16x64xf32>
    %cst_52 = arith.constant 4.471500e-02 : f32
    %155 = vector.broadcast %cst_52 : f32 to vector<16x64xf32>
    %156 = arith.mulf %155, %154 : vector<16x64xf32>
    %157 = arith.addf %152, %156 : vector<16x64xf32>
    %cst_53 = arith.constant 0.797884583 : f32
    %158 = vector.broadcast %cst_53 : f32 to vector<16x64xf32>
    %159 = arith.mulf %158, %157 : vector<16x64xf32>
    %160 = math.tanh %159 : vector<16x64xf32>
    %cst_54 = arith.constant 1.000000e+00 : f32
    %161 = vector.broadcast %cst_54 : f32 to vector<16x64xf32>
    %162 = arith.addf %161, %160 : vector<16x64xf32>
    %cst_55 = arith.constant 5.000000e-01 : f32
    %163 = vector.broadcast %cst_55 : f32 to vector<16x64xf32>
    %164 = arith.mulf %163, %162 : vector<16x64xf32>
    %165 = arith.mulf %152, %164 : vector<16x64xf32>
    %c0_56 = arith.constant 0 : index
    %c0_57 = arith.constant 0 : index
    %c0_58 = arith.constant 0 : index
    %166 = vector.load %arg12[%c0_56, %c0_57, %c0_58] : memref<2x64x32xf32, #tpu.memory_space<vmem>>, vector<1x64x32xf32>
    %167 = vector.shape_cast %166 : vector<1x64x32xf32> to vector<64x32xf32>
    %cst_59 = arith.constant dense<0.000000e+00> : vector<16x32xf32>
    %168 = tpu.matmul %165, %167, %cst_59 {dimension_numbers = #tpu.dot_dimension_numbers<[1], [0], [0], [1], [0, 0, 1, 1], [], []>} : vector<16x64xf32>, vector<64x32xf32>, vector<16x32xf32> -> vector<16x32xf32>
    %c0_60 = arith.constant 0 : index
    %c0_61 = arith.constant 0 : index
    %c0_62 = arith.constant 0 : index
    %169 = vector.load %arg13[%c0_60, %c0_61, %c0_62] : memref<2x1x32xf32, #tpu.memory_space<vmem>>, vector<1x1x32xf32>
    %170 = vector.shape_cast %169 : vector<1x1x32xf32> to vector<1x32xf32>
    %171 = vector.broadcast %170 : vector<1x32xf32> to vector<16x32xf32>
    %172 = arith.addf %168, %171 : vector<16x32xf32>
    %173 = arith.addf %172, %145 : vector<16x32xf32>
    %c0_63 = arith.constant 0 : index
    %c0_64 = arith.constant 0 : index
    %c0_65 = arith.constant 0 : index
    %174 = vector.load %arg14[%c0_63, %c0_64, %c0_65] : memref<2x1x32xf32, #tpu.memory_space<vmem>>, vector<1x1x32xf32>
    %175 = vector.shape_cast %174 : vector<1x1x32xf32> to vector<1x32xf32>
    %c0_66 = arith.constant 0 : index
    %c0_67 = arith.constant 0 : index
    %c0_68 = arith.constant 0 : index
    %176 = vector.load %arg15[%c0_66, %c0_67, %c0_68] : memref<2x1x32xf32, #tpu.memory_space<vmem>>, vector<1x1x32xf32>
    %177 = vector.shape_cast %176 : vector<1x1x32xf32> to vector<1x32xf32>
    %cst_69 = arith.constant dense<0.000000e+00> : vector<16xf32>
    %178 = vector.multi_reduction <add>, %173, %cst_69 [1] : vector<16x32xf32> to vector<16xf32>
    %179 = vector.shape_cast %178 : vector<16xf32> to vector<16x1xf32>
    %cst_70 = arith.constant 3.200000e+01 : f32
    %180 = vector.broadcast %cst_70 : f32 to vector<16x1xf32>
    %181 = arith.divf %179, %180 : vector<16x1xf32>
    %182 = vector.broadcast %181 : vector<16x1xf32> to vector<16x32xf32>
    %183 = arith.subf %173, %182 : vector<16x32xf32>
    %184 = arith.mulf %183, %183 : vector<16x32xf32>
    %cst_71 = arith.constant dense<0.000000e+00> : vector<16xf32>
    %185 = vector.multi_reduction <add>, %184, %cst_71 [1] : vector<16x32xf32> to vector<16xf32>
    %186 = vector.shape_cast %185 : vector<16xf32> to vector<16x1xf32>
    %cst_72 = arith.constant 3.200000e+01 : f32
    %187 = vector.broadcast %cst_72 : f32 to vector<16x1xf32>
    %188 = arith.divf %186, %187 : vector<16x1xf32>
    %189 = vector.broadcast %181 : vector<16x1xf32> to vector<16x32xf32>
    %190 = arith.subf %173, %189 : vector<16x32xf32>
    %cst_73 = arith.constant 9.99999974E-6 : f32
    %191 = vector.broadcast %cst_73 : f32 to vector<16x1xf32>
    %192 = arith.addf %188, %191 : vector<16x1xf32>
    %193 = math.rsqrt %192 : vector<16x1xf32>
    %194 = vector.broadcast %193 : vector<16x1xf32> to vector<16x32xf32>
    %195 = arith.mulf %190, %194 : vector<16x32xf32>
    %196 = vector.broadcast %175 : vector<1x32xf32> to vector<16x32xf32>
    %197 = arith.mulf %195, %196 : vector<16x32xf32>
    %198 = vector.broadcast %177 : vector<1x32xf32> to vector<16x32xf32>
    %199 = arith.addf %197, %198 : vector<16x32xf32>
    %c1 = arith.constant 1 : index
    %c0_74 = arith.constant 0 : index
    %c0_75 = arith.constant 0 : index
    %200 = vector.load %arg4[%c1, %c0_74, %c0_75] : memref<2x32x96xf32, #tpu.memory_space<vmem>>, vector<1x32x96xf32>
    %201 = vector.shape_cast %200 : vector<1x32x96xf32> to vector<32x96xf32>
    %cst_76 = arith.constant dense<0.000000e+00> : vector<16x96xf32>
    %202 = tpu.matmul %199, %201, %cst_76 {dimension_numbers = #tpu.dot_dimension_numbers<[1], [0], [0], [1], [0, 0, 1, 1], [], []>} : vector<16x32xf32>, vector<32x96xf32>, vector<16x96xf32> -> vector<16x96xf32>
    %c1_77 = arith.constant 1 : index
    %c0_78 = arith.constant 0 : index
    %c0_79 = arith.constant 0 : index
    %203 = vector.load %arg5[%c1_77, %c0_78, %c0_79] : memref<2x1x96xf32, #tpu.memory_space<vmem>>, vector<1x1x96xf32>
    %204 = vector.shape_cast %203 : vector<1x1x96xf32> to vector<1x96xf32>
    %205 = vector.broadcast %204 : vector<1x96xf32> to vector<16x96xf32>
    %206 = arith.addf %202, %205 : vector<16x96xf32>
    %207 = vector.extract_strided_slice %206 {offsets = [0, 0], sizes = [16, 32], strides = [1, 1]} : vector<16x96xf32> to vector<16x32xf32>
    %208 = vector.extract_strided_slice %206 {offsets = [0, 32], sizes = [16, 32], strides = [1, 1]} : vector<16x96xf32> to vector<16x32xf32>
    %209 = vector.extract_strided_slice %206 {offsets = [0, 64], sizes = [16, 32], strides = [1, 1]} : vector<16x96xf32> to vector<16x32xf32>
    %210 = vector.extract_strided_slice %207 {offsets = [0, 0], sizes = [8, 32], strides = [1, 1]} : vector<16x32xf32> to vector<8x32xf32>
    %211 = vector.extract_strided_slice %208 {offsets = [0, 0], sizes = [8, 32], strides = [1, 1]} : vector<16x32xf32> to vector<8x32xf32>
    %212 = vector.extract_strided_slice %209 {offsets = [0, 0], sizes = [8, 32], strides = [1, 1]} : vector<16x32xf32> to vector<8x32xf32>
    %213 = vector.broadcast %35 : vector<1x32xf32> to vector<8x32xf32>
    %214 = arith.mulf %210, %213 : vector<8x32xf32>
    %215 = vector.broadcast %42 : vector<1x32xf32> to vector<8x32xf32>
    %216 = arith.mulf %210, %215 : vector<8x32xf32>
    %217 = tpu.concatenate %214, %216 in 0 : vector<8x32xf32>, vector<8x32xf32> -> vector<16x32xf32>
    %cst_80 = arith.constant dense<0.000000e+00> : vector<16x8xf32>
    %218 = tpu.matmul %217, %211, %cst_80 {dimension_numbers = #tpu.dot_dimension_numbers<[1], [1], [0], [0], [0, 0, 1, 0], [], []>} : vector<16x32xf32>, vector<8x32xf32>, vector<16x8xf32> -> vector<16x8xf32>
    %219 = vector.broadcast %26 : vector<1x8xf32> to vector<16x8xf32>
    %220 = arith.addf %218, %219 : vector<16x8xf32>
    %cst_81 = arith.constant dense<0xFF800000> : vector<16xf32>
    %221 = vector.multi_reduction <maximumf>, %220, %cst_81 [1] : vector<16x8xf32> to vector<16xf32>
    %222 = vector.shape_cast %221 : vector<16xf32> to vector<16x1xf32>
    %223 = vector.broadcast %222 : vector<16x1xf32> to vector<16x8xf32>
    %224 = arith.subf %220, %223 : vector<16x8xf32>
    %225 = math.exp %224 : vector<16x8xf32>
    %cst_82 = arith.constant dense<0.000000e+00> : vector<16xf32>
    %226 = vector.multi_reduction <add>, %225, %cst_82 [1] : vector<16x8xf32> to vector<16xf32>
    %227 = vector.shape_cast %226 : vector<16xf32> to vector<16x1xf32>
    %228 = tpu.reciprocal %227 {approx = true} : vector<16x1xf32> -> vector<16x1xf32>
    %229 = vector.broadcast %228 : vector<16x1xf32> to vector<16x8xf32>
    %230 = arith.mulf %225, %229 : vector<16x8xf32>
    %cst_83 = arith.constant dense<0.000000e+00> : vector<16x32xf32>
    %231 = tpu.matmul %230, %212, %cst_83 {dimension_numbers = #tpu.dot_dimension_numbers<[1], [0], [0], [1], [0, 0, 1, 1], [], []>} : vector<16x8xf32>, vector<8x32xf32>, vector<16x32xf32> -> vector<16x32xf32>
    %232 = vector.extract_strided_slice %231 {offsets = [0, 0], sizes = [8, 32], strides = [1, 1]} : vector<16x32xf32> to vector<8x32xf32>
    %233 = vector.broadcast %35 : vector<1x32xf32> to vector<8x32xf32>
    %234 = arith.mulf %232, %233 : vector<8x32xf32>
    %235 = vector.extract_strided_slice %231 {offsets = [8, 0], sizes = [8, 32], strides = [1, 1]} : vector<16x32xf32> to vector<8x32xf32>
    %236 = vector.broadcast %42 : vector<1x32xf32> to vector<8x32xf32>
    %237 = arith.mulf %235, %236 : vector<8x32xf32>
    %238 = arith.addf %234, %237 : vector<8x32xf32>
    %239 = vector.extract_strided_slice %207 {offsets = [8, 0], sizes = [8, 32], strides = [1, 1]} : vector<16x32xf32> to vector<8x32xf32>
    %240 = vector.extract_strided_slice %208 {offsets = [8, 0], sizes = [8, 32], strides = [1, 1]} : vector<16x32xf32> to vector<8x32xf32>
    %241 = vector.extract_strided_slice %209 {offsets = [8, 0], sizes = [8, 32], strides = [1, 1]} : vector<16x32xf32> to vector<8x32xf32>
    %242 = vector.broadcast %35 : vector<1x32xf32> to vector<8x32xf32>
    %243 = arith.mulf %239, %242 : vector<8x32xf32>
    %244 = vector.broadcast %42 : vector<1x32xf32> to vector<8x32xf32>
    %245 = arith.mulf %239, %244 : vector<8x32xf32>
    %246 = tpu.concatenate %243, %245 in 0 : vector<8x32xf32>, vector<8x32xf32> -> vector<16x32xf32>
    %cst_84 = arith.constant dense<0.000000e+00> : vector<16x8xf32>
    %247 = tpu.matmul %246, %240, %cst_84 {dimension_numbers = #tpu.dot_dimension_numbers<[1], [1], [0], [0], [0, 0, 1, 0], [], []>} : vector<16x32xf32>, vector<8x32xf32>, vector<16x8xf32> -> vector<16x8xf32>
    %248 = vector.broadcast %27 : vector<1x8xf32> to vector<16x8xf32>
    %249 = arith.addf %247, %248 : vector<16x8xf32>
    %cst_85 = arith.constant dense<0xFF800000> : vector<16xf32>
    %250 = vector.multi_reduction <maximumf>, %249, %cst_85 [1] : vector<16x8xf32> to vector<16xf32>
    %251 = vector.shape_cast %250 : vector<16xf32> to vector<16x1xf32>
    %252 = vector.broadcast %251 : vector<16x1xf32> to vector<16x8xf32>
    %253 = arith.subf %249, %252 : vector<16x8xf32>
    %254 = math.exp %253 : vector<16x8xf32>
    %cst_86 = arith.constant dense<0.000000e+00> : vector<16xf32>
    %255 = vector.multi_reduction <add>, %254, %cst_86 [1] : vector<16x8xf32> to vector<16xf32>
    %256 = vector.shape_cast %255 : vector<16xf32> to vector<16x1xf32>
    %257 = tpu.reciprocal %256 {approx = true} : vector<16x1xf32> -> vector<16x1xf32>
    %258 = vector.broadcast %257 : vector<16x1xf32> to vector<16x8xf32>
    %259 = arith.mulf %254, %258 : vector<16x8xf32>
    %cst_87 = arith.constant dense<0.000000e+00> : vector<16x32xf32>
    %260 = tpu.matmul %259, %241, %cst_87 {dimension_numbers = #tpu.dot_dimension_numbers<[1], [0], [0], [1], [0, 0, 1, 1], [], []>} : vector<16x8xf32>, vector<8x32xf32>, vector<16x32xf32> -> vector<16x32xf32>
    %261 = vector.extract_strided_slice %260 {offsets = [0, 0], sizes = [8, 32], strides = [1, 1]} : vector<16x32xf32> to vector<8x32xf32>
    %262 = vector.broadcast %35 : vector<1x32xf32> to vector<8x32xf32>
    %263 = arith.mulf %261, %262 : vector<8x32xf32>
    %264 = vector.extract_strided_slice %260 {offsets = [8, 0], sizes = [8, 32], strides = [1, 1]} : vector<16x32xf32> to vector<8x32xf32>
    %265 = vector.broadcast %42 : vector<1x32xf32> to vector<8x32xf32>
    %266 = arith.mulf %264, %265 : vector<8x32xf32>
    %267 = arith.addf %263, %266 : vector<8x32xf32>
    %268 = tpu.concatenate %238, %267 in 0 : vector<8x32xf32>, vector<8x32xf32> -> vector<16x32xf32>
    %c1_88 = arith.constant 1 : index
    %c0_89 = arith.constant 0 : index
    %c0_90 = arith.constant 0 : index
    %269 = vector.load %arg6[%c1_88, %c0_89, %c0_90] : memref<2x32x32xf32, #tpu.memory_space<vmem>>, vector<1x32x32xf32>
    %270 = vector.shape_cast %269 : vector<1x32x32xf32> to vector<32x32xf32>
    %cst_91 = arith.constant dense<0.000000e+00> : vector<16x32xf32>
    %271 = tpu.matmul %268, %270, %cst_91 {dimension_numbers = #tpu.dot_dimension_numbers<[1], [0], [0], [1], [0, 0, 1, 1], [], []>} : vector<16x32xf32>, vector<32x32xf32>, vector<16x32xf32> -> vector<16x32xf32>
    %c1_92 = arith.constant 1 : index
    %c0_93 = arith.constant 0 : index
    %c0_94 = arith.constant 0 : index
    %272 = vector.load %arg7[%c1_92, %c0_93, %c0_94] : memref<2x1x32xf32, #tpu.memory_space<vmem>>, vector<1x1x32xf32>
    %273 = vector.shape_cast %272 : vector<1x1x32xf32> to vector<1x32xf32>
    %274 = vector.broadcast %273 : vector<1x32xf32> to vector<16x32xf32>
    %275 = arith.addf %271, %274 : vector<16x32xf32>
    %276 = arith.addf %275, %199 : vector<16x32xf32>
    %c1_95 = arith.constant 1 : index
    %c0_96 = arith.constant 0 : index
    %c0_97 = arith.constant 0 : index
    %277 = vector.load %arg8[%c1_95, %c0_96, %c0_97] : memref<2x1x32xf32, #tpu.memory_space<vmem>>, vector<1x1x32xf32>
    %278 = vector.shape_cast %277 : vector<1x1x32xf32> to vector<1x32xf32>
    %c1_98 = arith.constant 1 : index
    %c0_99 = arith.constant 0 : index
    %c0_100 = arith.constant 0 : index
    %279 = vector.load %arg9[%c1_98, %c0_99, %c0_100] : memref<2x1x32xf32, #tpu.memory_space<vmem>>, vector<1x1x32xf32>
    %280 = vector.shape_cast %279 : vector<1x1x32xf32> to vector<1x32xf32>
    %cst_101 = arith.constant dense<0.000000e+00> : vector<16xf32>
    %281 = vector.multi_reduction <add>, %276, %cst_101 [1] : vector<16x32xf32> to vector<16xf32>
    %282 = vector.shape_cast %281 : vector<16xf32> to vector<16x1xf32>
    %cst_102 = arith.constant 3.200000e+01 : f32
    %283 = vector.broadcast %cst_102 : f32 to vector<16x1xf32>
    %284 = arith.divf %282, %283 : vector<16x1xf32>
    %285 = vector.broadcast %284 : vector<16x1xf32> to vector<16x32xf32>
    %286 = arith.subf %276, %285 : vector<16x32xf32>
    %287 = arith.mulf %286, %286 : vector<16x32xf32>
    %cst_103 = arith.constant dense<0.000000e+00> : vector<16xf32>
    %288 = vector.multi_reduction <add>, %287, %cst_103 [1] : vector<16x32xf32> to vector<16xf32>
    %289 = vector.shape_cast %288 : vector<16xf32> to vector<16x1xf32>
    %cst_104 = arith.constant 3.200000e+01 : f32
    %290 = vector.broadcast %cst_104 : f32 to vector<16x1xf32>
    %291 = arith.divf %289, %290 : vector<16x1xf32>
    %292 = vector.broadcast %284 : vector<16x1xf32> to vector<16x32xf32>
    %293 = arith.subf %276, %292 : vector<16x32xf32>
    %cst_105 = arith.constant 9.99999974E-6 : f32
    %294 = vector.broadcast %cst_105 : f32 to vector<16x1xf32>
    %295 = arith.addf %291, %294 : vector<16x1xf32>
    %296 = math.rsqrt %295 : vector<16x1xf32>
    %297 = vector.broadcast %296 : vector<16x1xf32> to vector<16x32xf32>
    %298 = arith.mulf %293, %297 : vector<16x32xf32>
    %299 = vector.broadcast %278 : vector<1x32xf32> to vector<16x32xf32>
    %300 = arith.mulf %298, %299 : vector<16x32xf32>
    %301 = vector.broadcast %280 : vector<1x32xf32> to vector<16x32xf32>
    %302 = arith.addf %300, %301 : vector<16x32xf32>
    %c1_106 = arith.constant 1 : index
    %c0_107 = arith.constant 0 : index
    %c0_108 = arith.constant 0 : index
    %303 = vector.load %arg10[%c1_106, %c0_107, %c0_108] : memref<2x32x64xf32, #tpu.memory_space<vmem>>, vector<1x32x64xf32>
    %304 = vector.shape_cast %303 : vector<1x32x64xf32> to vector<32x64xf32>
    %cst_109 = arith.constant dense<0.000000e+00> : vector<16x64xf32>
    %305 = tpu.matmul %302, %304, %cst_109 {dimension_numbers = #tpu.dot_dimension_numbers<[1], [0], [0], [1], [0, 0, 1, 1], [], []>} : vector<16x32xf32>, vector<32x64xf32>, vector<16x64xf32> -> vector<16x64xf32>
    %c1_110 = arith.constant 1 : index
    %c0_111 = arith.constant 0 : index
    %c0_112 = arith.constant 0 : index
    %306 = vector.load %arg11[%c1_110, %c0_111, %c0_112] : memref<2x1x64xf32, #tpu.memory_space<vmem>>, vector<1x1x64xf32>
    %307 = vector.shape_cast %306 : vector<1x1x64xf32> to vector<1x64xf32>
    %308 = vector.broadcast %307 : vector<1x64xf32> to vector<16x64xf32>
    %309 = arith.addf %305, %308 : vector<16x64xf32>
    %310 = arith.mulf %309, %309 : vector<16x64xf32>
    %311 = arith.mulf %309, %310 : vector<16x64xf32>
    %cst_113 = arith.constant 4.471500e-02 : f32
    %312 = vector.broadcast %cst_113 : f32 to vector<16x64xf32>
    %313 = arith.mulf %312, %311 : vector<16x64xf32>
    %314 = arith.addf %309, %313 : vector<16x64xf32>
    %cst_114 = arith.constant 0.797884583 : f32
    %315 = vector.broadcast %cst_114 : f32 to vector<16x64xf32>
    %316 = arith.mulf %315, %314 : vector<16x64xf32>
    %317 = math.tanh %316 : vector<16x64xf32>
    %cst_115 = arith.constant 1.000000e+00 : f32
    %318 = vector.broadcast %cst_115 : f32 to vector<16x64xf32>
    %319 = arith.addf %318, %317 : vector<16x64xf32>
    %cst_116 = arith.constant 5.000000e-01 : f32
    %320 = vector.broadcast %cst_116 : f32 to vector<16x64xf32>
    %321 = arith.mulf %320, %319 : vector<16x64xf32>
    %322 = arith.mulf %309, %321 : vector<16x64xf32>
    %c1_117 = arith.constant 1 : index
    %c0_118 = arith.constant 0 : index
    %c0_119 = arith.constant 0 : index
    %323 = vector.load %arg12[%c1_117, %c0_118, %c0_119] : memref<2x64x32xf32, #tpu.memory_space<vmem>>, vector<1x64x32xf32>
    %324 = vector.shape_cast %323 : vector<1x64x32xf32> to vector<64x32xf32>
    %cst_120 = arith.constant dense<0.000000e+00> : vector<16x32xf32>
    %325 = tpu.matmul %322, %324, %cst_120 {dimension_numbers = #tpu.dot_dimension_numbers<[1], [0], [0], [1], [0, 0, 1, 1], [], []>} : vector<16x64xf32>, vector<64x32xf32>, vector<16x32xf32> -> vector<16x32xf32>
    %c1_121 = arith.constant 1 : index
    %c0_122 = arith.constant 0 : index
    %c0_123 = arith.constant 0 : index
    %326 = vector.load %arg13[%c1_121, %c0_122, %c0_123] : memref<2x1x32xf32, #tpu.memory_space<vmem>>, vector<1x1x32xf32>
    %327 = vector.shape_cast %326 : vector<1x1x32xf32> to vector<1x32xf32>
    %328 = vector.broadcast %327 : vector<1x32xf32> to vector<16x32xf32>
    %329 = arith.addf %325, %328 : vector<16x32xf32>
    %330 = arith.addf %329, %302 : vector<16x32xf32>
    %c1_124 = arith.constant 1 : index
    %c0_125 = arith.constant 0 : index
    %c0_126 = arith.constant 0 : index
    %331 = vector.load %arg14[%c1_124, %c0_125, %c0_126] : memref<2x1x32xf32, #tpu.memory_space<vmem>>, vector<1x1x32xf32>
    %332 = vector.shape_cast %331 : vector<1x1x32xf32> to vector<1x32xf32>
    %c1_127 = arith.constant 1 : index
    %c0_128 = arith.constant 0 : index
    %c0_129 = arith.constant 0 : index
    %333 = vector.load %arg15[%c1_127, %c0_128, %c0_129] : memref<2x1x32xf32, #tpu.memory_space<vmem>>, vector<1x1x32xf32>
    %334 = vector.shape_cast %333 : vector<1x1x32xf32> to vector<1x32xf32>
    %cst_130 = arith.constant dense<0.000000e+00> : vector<16xf32>
    %335 = vector.multi_reduction <add>, %330, %cst_130 [1] : vector<16x32xf32> to vector<16xf32>
    %336 = vector.shape_cast %335 : vector<16xf32> to vector<16x1xf32>
    %cst_131 = arith.constant 3.200000e+01 : f32
    %337 = vector.broadcast %cst_131 : f32 to vector<16x1xf32>
    %338 = arith.divf %336, %337 : vector<16x1xf32>
    %339 = vector.broadcast %338 : vector<16x1xf32> to vector<16x32xf32>
    %340 = arith.subf %330, %339 : vector<16x32xf32>
    %341 = arith.mulf %340, %340 : vector<16x32xf32>
    %cst_132 = arith.constant dense<0.000000e+00> : vector<16xf32>
    %342 = vector.multi_reduction <add>, %341, %cst_132 [1] : vector<16x32xf32> to vector<16xf32>
    %343 = vector.shape_cast %342 : vector<16xf32> to vector<16x1xf32>
    %cst_133 = arith.constant 3.200000e+01 : f32
    %344 = vector.broadcast %cst_133 : f32 to vector<16x1xf32>
    %345 = arith.divf %343, %344 : vector<16x1xf32>
    %346 = vector.broadcast %338 : vector<16x1xf32> to vector<16x32xf32>
    %347 = arith.subf %330, %346 : vector<16x32xf32>
    %cst_134 = arith.constant 9.99999974E-6 : f32
    %348 = vector.broadcast %cst_134 : f32 to vector<16x1xf32>
    %349 = arith.addf %345, %348 : vector<16x1xf32>
    %350 = math.rsqrt %349 : vector<16x1xf32>
    %351 = vector.broadcast %350 : vector<16x1xf32> to vector<16x32xf32>
    %352 = arith.mulf %347, %351 : vector<16x32xf32>
    %353 = vector.broadcast %332 : vector<1x32xf32> to vector<16x32xf32>
    %354 = arith.mulf %352, %353 : vector<16x32xf32>
    %355 = vector.broadcast %334 : vector<1x32xf32> to vector<16x32xf32>
    %356 = arith.addf %354, %355 : vector<16x32xf32>
    %357 = vector.extract_strided_slice %356 {offsets = [0, 0], sizes = [1, 32], strides = [1, 1]} : vector<16x32xf32> to vector<1x32xf32>
    %358 = vector.extract_strided_slice %356 {offsets = [8, 0], sizes = [1, 32], strides = [1, 1]} : vector<16x32xf32> to vector<1x32xf32>
    %359 = tpu.concatenate %357, %358 in 0 : vector<1x32xf32>, vector<1x32xf32> -> vector<2x32xf32>
    %c0_135 = arith.constant 0 : index
    %c0_136 = arith.constant 0 : index
    %360 = vector.load %arg16[%c0_135, %c0_136] : memref<32x32xf32, #tpu.memory_space<vmem>>, vector<32x32xf32>
    %cst_137 = arith.constant dense<0.000000e+00> : vector<2x32xf32>
    %361 = tpu.matmul %359, %360, %cst_137 {dimension_numbers = #tpu.dot_dimension_numbers<[1], [0], [0], [1], [0, 0, 1, 1], [], []>} : vector<2x32xf32>, vector<32x32xf32>, vector<2x32xf32> -> vector<2x32xf32>
    %c0_138 = arith.constant 0 : index
    %c0_139 = arith.constant 0 : index
    %362 = vector.load %arg17[%c0_138, %c0_139] : memref<1x32xf32, #tpu.memory_space<vmem>>, vector<1x32xf32>
    %363 = vector.broadcast %362 : vector<1x32xf32> to vector<2x32xf32>
    %364 = arith.addf %361, %363 : vector<2x32xf32>
    %365 = math.tanh %364 : vector<2x32xf32>
    %c0_140 = arith.constant 0 : index
    %c0_141 = arith.constant 0 : index
    %366 = vector.load %arg18[%c0_140, %c0_141] : memref<2x32xf32, #tpu.memory_space<vmem>>, vector<2x32xf32>
    tpu.vector_store %arg18[%c0_140, %c0_141], %365 {strides = array<i32>} : memref<2x32xf32, #tpu.memory_space<vmem>>, vector<2x32xf32>,
    return
  }
}

</mosaic_0001>

<llo_original>
// kernel: forward_packed.1
$region0: #{forward_packed.1}
  #allocation0 [shape = 'u32[]', space=smem, size = 0x4, offset = 0x4, fixed_abs, tag = 'smem constant byte address 0x4 - core index']
  #allocation1 [shape = 'u32[144,128]{1,0:T(1,128)}', space=vmem, size = 0x12000, scoped, tag = 'internal scratch']
  %s0 = inlined_call_operand.hbm [shape: f32[16,32], index: 0, kind: input, shape index: {}]
  %s1 = inlined_call_operand.hbm [shape: f32[2,8], index: 1, kind: input, shape index: {}]
  %s2 = inlined_call_operand.hbm [shape: f32[1,32], index: 2, kind: input, shape index: {}]
  %s3 = inlined_call_operand.hbm [shape: f32[1,32], index: 3, kind: input, shape index: {}]
  %s4 = inlined_call_operand.vmem [shape: f32[2,32,96], index: 4, kind: input, shape index: {}]
  %s5 = inlined_call_operand.vmem [shape: f32[2,1,96], index: 5, kind: input, shape index: {}]
  %s6 = inlined_call_operand.vmem [shape: f32[2,32,32], index: 6, kind: input, shape index: {}]
  %s7 = inlined_call_operand.vmem [shape: f32[2,1,32], index: 7, kind: input, shape index: {}]
  %s8 = inlined_call_operand.vmem [shape: f32[2,1,32], index: 8, kind: input, shape index: {}]
  %s9 = inlined_call_operand.vmem [shape: f32[2,1,32], index: 9, kind: input, shape index: {}]
  %s10 = inlined_call_operand.vmem [shape: f32[2,32,64], index: 10, kind: input, shape index: {}]
  %s11 = inlined_call_operand.vmem [shape: f32[2,1,64], index: 11, kind: input, shape index: {}]
  %s12 = inlined_call_operand.vmem [shape: f32[2,64,32], index: 12, kind: input, shape index: {}]
  %s13 = inlined_call_operand.vmem [shape: f32[2,1,32], index: 13, kind: input, shape index: {}]
  %s14 = inlined_call_operand.vmem [shape: f32[2,1,32], index: 14, kind: input, shape index: {}]
  %s15 = inlined_call_operand.vmem [shape: f32[2,1,32], index: 15, kind: input, shape index: {}]
  %s16 = inlined_call_operand.hbm [shape: f32[32,32], index: 16, kind: input, shape index: {}]
  %s17 = inlined_call_operand.vmem [shape: f32[1,32], index: 17, kind: input, shape index: {}]
  %s18 = inlined_call_operand.hbm [shape: f32[2,32], index: 18, kind: output, shape index: {}]
  %s19 = sld [smem:[#allocation0]]
  $region102: #{forward_packed.1} parent=0
    _
  %s21 = ssub.s32 1, %s19
  %s22 = scalar_select 0, %s21, %s19
  $region1: #{forward_packed.1} parent=0
    #allocation2 [shape = 'u8[8192]{0}', space=vmem, size = 0x2000, scoped, tag = 'input window, operand 0, single buffered']
    #allocation3 [shape = 's32[1]{0}', space=sflag, size = 0x4, scoped, tag = 'scoped memory for forward_packed.1']
    #allocation4 [shape = 's32[1]{0}', space=sflag, size = 0x4, scoped, tag = 'scoped memory for forward_packed.1']
    #allocation5 [shape = 'u8[1024]{0}', space=vmem, size = 0x400, scoped, tag = 'input window, operand 1, single buffered']
    #allocation6 [shape = 's32[1]{0}', space=sflag, size = 0x4, scoped, tag = 'scoped memory for forward_packed.1']
    #allocation7 [shape = 'u8[512]{0}', space=vmem, size = 0x400, scoped, tag = 'input window, operand 2, single buffered']
    #allocation8 [shape = 'u8[512]{0}', space=vmem, size = 0x400, scoped, tag = 'input window, operand 3, single buffered']
    #allocation9 [shape = 's32[1]{0}', space=sflag, size = 0x4, scoped, tag = 'scoped memory for forward_packed.1']
    #allocation10 [shape = 'u8[16384]{0}', space=vmem, size = 0x4000, scoped, tag = 'input window, operand 16, single buffered']
    #allocation11 [shape = 'u8[1024]{0}', space=vmem, size = 0x400, scoped, tag = 'output window, operand 0, single buffered']
    %23 = vsyncpa [#allocation3], 0
    %24 = vsyncpa [#allocation6], 0
    %25 = vsyncpa [#allocation9], 0
    %26 = vsyncpa [#allocation4], 0
    // Predicated region
    $region2: #{forward_packed.1} parent=1 // pred_check
      _
    $region3: #{forward_packed.1} parent=1 // pred_check_branch
      %28 = sbr.rel (0) target = $region5
    $region4: #{forward_packed.1} parent=1 // pred_region
      %s30 = ssub.s32 256, 256
      %31 = vsyncadd [#allocation3], %s30
      %s32 = sshll.u32 [#allocation2], 4
      %s33 = int_to_ptr.vmem [resolvable:$true] %s32
      %38 = dma.hbm_to_vmem [thread:$0]  %s0, 256, %s33, [#allocation3], 128, 128, 8
    $region5: #{forward_packed.1} parent=1 // pred_fallthru
      _
    // Predicated region
    $region6: #{forward_packed.1} parent=1 // pred_check
      _
    $region7: #{forward_packed.1} parent=1 // pred_check_branch
      %40 = sbr.rel (0) target = $region9
    $region8: #{forward_packed.1} parent=1 // pred_region
      %s42 = ssub.s32 32, 32
      %43 = vsyncadd [#allocation6], %s42
      %s45 = sshll.u32 [#allocation5], 4
      %s46 = int_to_ptr.vmem [resolvable:$true] %s45
      %48 = dma.hbm_to_vmem [thread:$0]  %s1, 32, %s46, [#allocation6]
    $region9: #{forward_packed.1} parent=1 // pred_fallthru
      _
    // Predicated region
    $region10: #{forward_packed.1} parent=1 // pred_check
      _
    $region11: #{forward_packed.1} parent=1 // pred_check_branch
      %50 = sbr.rel (0) target = $region13
    $region12: #{forward_packed.1} parent=1 // pred_region
      %s52 = ssub.s32 16, 16
      %53 = vsyncadd [#allocation6], %s52
      %s55 = sshll.u32 [#allocation7], 4
      %s56 = int_to_ptr.vmem [resolvable:$true] %s55
      %58 = dma.hbm_to_vmem [thread:$0]  %s2, 16, %s56, [#allocation6]
    $region13: #{forward_packed.1} parent=1 // pred_fallthru
      _
    // Predicated region
    $region14: #{forward_packed.1} parent=1 // pred_check
      _
    $region15: #{forward_packed.1} parent=1 // pred_check_branch
      %60 = sbr.rel (0) target = $region17
    $region16: #{forward_packed.1} parent=1 // pred_region
      %s62 = ssub.s32 16, 16
      %63 = vsyncadd [#allocation9], %s62
      %s65 = sshll.u32 [#allocation8], 4
      %s66 = int_to_ptr.vmem [resolvable:$true] %s65
      %68 = dma.hbm_to_vmem [thread:$0]  %s3, 16, %s66, [#allocation9]
    $region17: #{forward_packed.1} parent=1 // pred_fallthru
      _
    // Predicated region
    $region18: #{forward_packed.1} parent=1 // pred_check
      _
    $region19: #{forward_packed.1} parent=1 // pred_check_branch
      %70 = sbr.rel (0) target = $region21
    $region20: #{forward_packed.1} parent=1 // pred_region
      _
    $region21: #{forward_packed.1} parent=1 // pred_fallthru
      _
    // Predicated region
    $region22: #{forward_packed.1} parent=1 // pred_check
      _
    $region23: #{forward_packed.1} parent=1 // pred_check_branch
      %72 = sbr.rel (0) target = $region25
    $region24: #{forward_packed.1} parent=1 // pred_region
      _
    $region25: #{forward_packed.1} parent=1 // pred_fallthru
      _
    // Predicated region
    $region26: #{forward_packed.1} parent=1 // pred_check
      _
    $region27: #{forward_packed.1} parent=1 // pred_check_branch
      %74 = sbr.rel (0) target = $region29
    $region28: #{forward_packed.1} parent=1 // pred_region
      _
    $region29: #{forward_packed.1} parent=1 // pred_fallthru
      _
    // Predicated region
    $region30: #{forward_packed.1} parent=1 // pred_check
      _
    $region31: #{forward_packed.1} parent=1 // pred_check_branch
      %76 = sbr.rel (0) target = $region33
    $region32: #{forward_packed.1} parent=1 // pred_region
      _
    $region33: #{forward_packed.1} parent=1 // pred_fallthru
      _
    // Predicated region
    $region34: #{forward_packed.1} parent=1 // pred_check
      _
    $region35: #{forward_packed.1} parent=1 // pred_check_branch
      %78 = sbr.rel (0) target = $region37
    $region36: #{forward_packed.1} parent=1 // pred_region
      _
    $region37: #{forward_packed.1} parent=1 // pred_fallthru
      _
    // Predicated region
    $region38: #{forward_packed.1} parent=1 // pred_check
      _
    $region39: #{forward_packed.1} parent=1 // pred_check_branch
      %80 = sbr.rel (0) target = $region41
    $region40: #{forward_packed.1} parent=1 // pred_region
      _
    $region41: #{forward_packed.1} parent=1 // pred_fallthru
      _
    // Predicated region
    $region42: #{forward_packed.1} parent=1 // pred_check
      _
    $region43: #{forward_packed.1} parent=1 // pred_check_branch
      %82 = sbr.rel (0) target = $region45
    $region44: #{forward_packed.1} parent=1 // pred_region
      _
    $region45: #{forward_packed.1} parent=1 // pred_fallthru
      _
    // Predicated region
    $region46: #{forward_packed.1} parent=1 // pred_check
      _
    $region47: #{forward_packed.1} parent=1 // pred_check_branch
      %84 = sbr.rel (0) target = $region49
    $region48: #{forward_packed.1} parent=1 // pred_region
      _
    $region49: #{forward_packed.1} parent=1 // pred_fallthru
      _
    // Predicated region
    $region50: #{forward_packed.1} parent=1 // pred_check
      _
    $region51: #{forward_packed.1} parent=1 // pred_check_branch
      %86 = sbr.rel (0) target = $region53
    $region52: #{forward_packed.1} parent=1 // pred_region
      _
    $region53: #{forward_packed.1} parent=1 // pred_fallthru
      _
    // Predicated region
    $region54: #{forward_packed.1} parent=1 // pred_check
      _
    $region55: #{forward_packed.1} parent=1 // pred_check_branch
      %88 = sbr.rel (0) target = $region57
    $region56: #{forward_packed.1} parent=1 // pred_region
      _
    $region57: #{forward_packed.1} parent=1 // pred_fallthru
      _
    // Predicated region
    $region58: #{forward_packed.1} parent=1 // pred_check
      _
    $region59: #{forward_packed.1} parent=1 // pred_check_branch
      %90 = sbr.rel (0) target = $region61
    $region60: #{forward_packed.1} parent=1 // pred_region
      _
    $region61: #{forward_packed.1} parent=1 // pred_fallthru
      _
    // Predicated region
    $region62: #{forward_packed.1} parent=1 // pred_check
      _
    $region63: #{forward_packed.1} parent=1 // pred_check_branch
      %92 = sbr.rel (0) target = $region65
    $region64: #{forward_packed.1} parent=1 // pred_region
      _
    $region65: #{forward_packed.1} parent=1 // pred_fallthru
      _
    // Predicated region
    $region66: #{forward_packed.1} parent=1 // pred_check
      _
    $region67: #{forward_packed.1} parent=1 // pred_check_branch
      %94 = sbr.rel (0) target = $region69
    $region68: #{forward_packed.1} parent=1 // pred_region
      %s96 = ssub.s32 512, 512
      %97 = vsyncadd [#allocation9], %s96
      %s98 = sshll.u32 [#allocation10], 4
      %s99 = int_to_ptr.vmem [resolvable:$true] %s98
      %104 = dma.hbm_to_vmem [thread:$0]  %s16, 512, %s99, [#allocation9], 128, 128, 8
    $region69: #{forward_packed.1} parent=1 // pred_fallthru
      _
    // Predicated region
    $region70: #{forward_packed.1} parent=1 // pred_check
      _
    $region71: #{forward_packed.1} parent=1 // pred_check_branch
      %106 = sbr.rel (0) target = $region73
    $region72: #{forward_packed.1} parent=1 // pred_region
      _
    $region73: #{forward_packed.1} parent=1 // pred_fallthru
      _
    // Predicated region
    $region74: #{forward_packed.1} parent=1 // pred_check
      _
    $region75: #{forward_packed.1} parent=1 // pred_check_branch
      %108 = sbr.rel (0) target = $region77
    $region76: #{forward_packed.1} parent=1 // pred_region
      %109 = dma.done [#allocation3], 256
    $region77: #{forward_packed.1} parent=1 // pred_fallthru
      _
    // Predicated region
    $region78: #{forward_packed.1} parent=1 // pred_check
      _
    $region79: #{forward_packed.1} parent=1 // pred_check_branch
      %111 = sbr.rel (0) target = $region81
    $region80: #{forward_packed.1} parent=1 // pred_region
      %112 = dma.done [#allocation6], 32
    $region81: #{forward_packed.1} parent=1 // pred_fallthru
      _
    // Predicated region
    $region82: #{forward_packed.1} parent=1 // pred_check
      _
    $region83: #{forward_packed.1} parent=1 // pred_check_branch
      %114 = sbr.rel (0) target = $region85
    $region84: #{forward_packed.1} parent=1 // pred_region
      %115 = dma.done [#allocation6], 16
    $region85: #{forward_packed.1} parent=1 // pred_fallthru
      _
    // Predicated region
    $region86: #{forward_packed.1} parent=1 // pred_check
      _
    $region87: #{forward_packed.1} parent=1 // pred_check_branch
      %117 = sbr.rel (0) target = $region89
    $region88: #{forward_packed.1} parent=1 // pred_region
      %118 = dma.done [#allocation9], 16
    $region89: #{forward_packed.1} parent=1 // pred_fallthru
      _
    // Predicated region
    $region90: #{forward_packed.1} parent=1 // pred_check
      _
    $region91: #{forward_packed.1} parent=1 // pred_check_branch
      %120 = sbr.rel (0) target = $region93
    $region92: #{forward_packed.1} parent=1 // pred_region
      %121 = dma.done [#allocation9], 512
    $region93: #{forward_packed.1} parent=1 // pred_fallthru
      _
    %v122 = vld [vmem:[#allocation2] sm:$0xff]
    %v123 = vld [vmem:[#allocation2 + $0x8] sm:$0xff]
    %v124 = vld [vmem:[#allocation7] sm:$0x1]
    %v125 = vld [vmem:[#allocation8] sm:$0x1]
    %vm126 = vcmask 261120
    %v127 = vsel %vm126, %v122, 0.0
    %128 = vadd.xlane.f32.xlu0 %v127
    %v129 = vpop.xlane.xlu0 %128
    %v130 = vsel %vm126, %v123, 0.0
    %131 = vadd.xlane.f32.xlu0 %v130
    %v132 = vpop.xlane.xlu0 %131
    %v133 = vrcp.pop 32.0
    %v134 = vmul.f32 %v129, %v133
    %v135 = vmul.f32 %v132, %v133
    %v136 = vsub.f32 %v122, %v134
    %v137 = vsub.f32 %v123, %v135
    %v138 = vmul.f32 %v136, %v136
    %v139 = vmul.f32 %v137, %v137
    %v140 = vsel %vm126, %v138, 0.0
    %141 = vadd.xlane.f32.xlu0 %v140
    %v142 = vpop.xlane.xlu0 %141
    %v143 = vsel %vm126, %v139, 0.0
    %144 = vadd.xlane.f32.xlu0 %v143
    %v145 = vpop.xlane.xlu0 %144
    %v146 = vmul.f32 %v142, %v133
    %v147 = vmul.f32 %v145, %v133
    %v148 = vadd.f32 %v146, 1e-05
    %v149 = vadd.f32 %v147, 1e-05
    %v150 = vrsqrt.pop %v148
    %v151 = vrsqrt.pop %v149
    %v152 = vmul.f32 %v136, %v150
    %v153 = vmul.f32 %v137, %v151
    %v155 = vlaneseq
    %v156 = vshrl.u32 %v155, 7
    %v157 = vsub.s32 0, %v156
    %v158 = vrot.slane %v124, %v157
    %v160 = vmul.f32 %v152, %v158
    %v161 = vmul.f32 %v153, %v158
    %v163 = vlaneseq
    %v164 = vshrl.u32 %v163, 7
    %v165 = vsub.s32 0, %v164
    %v166 = vrot.slane %v125, %v165
    %v168 = vadd.f32 %v160, %v166
    %v169 = vadd.f32 %v161, %v166
    %v170 = vld [vmem:[#allocation5] sm:$0x3]
    %v171 = vlaneseq
    %v172 = vand.u32 %v171, 127
    %vm173 = vcmp.ge.s32.totalorder %v172, 0
    %vm174 = vcmp.lt.s32.totalorder %v172, 16
    %vm175 = vmand %vm173, %vm174
    %v176 = vsel %vm175, 1, 0
    %v177 = vcvt.s32.f32 %v176
    %vm178 = vcmp.ge.s32.totalorder %v172, 16
    %vm179 = vcmp.lt.s32.totalorder %v172, 32
    %vm180 = vmand %vm178, %vm179
    %v181 = vsel %vm180, 1, 0
    %v182 = vcvt.s32.f32 %v181
    %v183 = vld [vmem:[%s4] sm:$0xff]
    %v184 = vld [vmem:[%s4 + $0x8] sm:$0xff]
    %v185 = vld [vmem:[%s4 + $0x10] sm:$0xff]
    %v186 = vld [vmem:[%s4 + $0x18] sm:$0xff]
    %v187 = vld [vmem:[%s5] sm:$0x1]
    %v189 = vlaneseq
    %v190 = vshrl.u32 %v189, 7
    %v191 = vsub.s32 0, %v190
    %v192 = vrot.slane %v187, %v191
    %v195 = vsel %vm126, %v168, 0
    %v198 = vsel %vm126, %v169, 0
    %200 = vmatprep.subr.mxu0 0.0
    %201 = vmatpush1.msra.mxu0 0.0
    %202 = vmatprep.subr.mxu0 0.0
    %203 = vmatpush1.msra.mxu0 0.0
    %204 = vmatprep.subr.mxu0 0.0
    %205 = vmatpush1.msra.mxu0 0.0
    %206 = vmatprep.subr.mxu0 0.0
    %207 = vmatpush1.msra.mxu0 0.0
    %208 = vmatprep.subr.mxu0 0.0
    %209 = vmatpush1.msra.mxu0 0.0
    %210 = vmatprep.subr.mxu0 0.0
    %211 = vmatpush1.msra.mxu0 0.0
    %212 = vmatprep.subr.mxu0 0.0
    %213 = vmatpush1.msra.mxu0 0.0
    %214 = vmatprep.subr.mxu0 0.0
    %215 = vmatpush1.msra.mxu0 0.0
    %216 = vmatprep.subr.mxu0 0.0
    %217 = vmatpush1.msra.mxu0 0.0
    %218 = vmatprep.subr.mxu0 0.0
    %219 = vmatpush1.msra.mxu0 0.0
    %220 = vmatprep.subr.mxu0 0.0
    %221 = vmatpush1.msra.mxu0 0.0
    %222 = vmatprep.subr.mxu0 0.0
    %223 = vmatpush1.msra.mxu0 0.0
    %224 = vmatprep.subr.mxu0 0.0
    %225 = vmatpush1.msra.mxu0 %v186
    %226 = vmatprep.subr.mxu0 0.0
    %227 = vmatpush1.msra.mxu0 %v185
    %228 = vmatprep.subr.mxu0 0.0
    %229 = vmatpush1.msra.mxu0 %v184
    %230 = vmatprep.subr.mxu0 0.0
    %231 = vmatpush1.msra.mxu0 %v183
    %232 = vmatprep.subr.mxu0 0.0
    %233 = vmatpush2.msra.mxu0 0.0
    %234 = vmatprep.subr.mxu0 0.0
    %235 = vmatpush2.msra.mxu0 0.0
    %236 = vmatprep.subr.mxu0 0.0
    %237 = vmatpush2.msra.mxu0 0.0
    %238 = vmatprep.subr.mxu0 0.0
    %239 = vmatpush2.msra.mxu0 0.0
    %240 = vmatprep.subr.mxu0 0.0
    %241 = vmatpush2.msra.mxu0 0.0
    %242 = vmatprep.subr.mxu0 0.0
    %243 = vmatpush2.msra.mxu0 0.0
    %244 = vmatprep.subr.mxu0 0.0
    %245 = vmatpush2.msra.mxu0 0.0
    %246 = vmatprep.subr.mxu0 0.0
    %247 = vmatpush2.msra.mxu0 0.0
    %248 = vmatprep.subr.mxu0 0.0
    %249 = vmatpush2.msra.mxu0 0.0
    %250 = vmatprep.subr.mxu0 0.0
    %251 = vmatpush2.msra.mxu0 0.0
    %252 = vmatprep.subr.mxu0 0.0
    %253 = vmatpush2.msra.mxu0 0.0
    %254 = vmatprep.subr.mxu0 0.0
    %255 = vmatpush2.msra.mxu0 0.0
    %256 = vmatprep.subr.mxu0 0.0
    %257 = vmatpush2.msra.mxu0 0.0
    %258 = vmatprep.subr.mxu0 0.0
    %259 = vmatpush2.msra.mxu0 0.0
    %260 = vmatprep.subr.mxu0 0.0
    %261 = vmatpush2.msra.mxu0 0.0
    %262 = vmatprep.subr.mxu0 0.0
    %263 = vmatpush2.msra.mxu0 0.0
    %264 = vmatprep.mubr.f32.mxu0 0.0
    %265 = vmatmul.mubr.f32.gmra.mxu0 %v195
    %v266 = vpop.f32.mrf.mxu0
    %v267 = vadd.f32 %v192, %v266
    %v268 = vpop.f32.mrf.mxu0
    %269 = vmatprep.mubr.f32.mxu0 0.0
    %270 = vmatmul.mubr.f32.gmra.mxu0 %v198
    %v271 = vpop.f32.mrf.mxu0
    %v272 = vadd.f32 %v192, %v271
    %v273 = vpop.f32.mrf.mxu0
    %274 = vdwg.mxu0
    %v275 = vmul.f32 %v267, %v177
    %v276 = vmul.f32 %v267, %v182
    %v277 = vlaneseq
    %v278 = vshrl.u32 %v277, 7
    %v279 = vsub.s32 0, %v278
    %v280 = vrot.slane %v170, %v279
    %282 = vrot.lane.b32.xlu0 %v267, 96
    %v283 = vpop.permute.xlu0 %282
    %v285 = vsel %vm126, %v275, 0
    %v288 = vsel %vm126, %v276, 0
    %v290 = vsel %vm126, %v283, 0
    %292 = vmatprep.subr.mxu0 0.0
    %293 = vmatpush1.xpose.msra.mxu0 0.0
    %294 = vmatprep.subr.mxu0 0.0
    %295 = vmatpush1.xpose.msra.mxu0 0.0
    %296 = vmatprep.subr.mxu0 0.0
    %297 = vmatpush1.xpose.msra.mxu0 0.0
    %298 = vmatprep.subr.mxu0 0.0
    %299 = vmatpush1.xpose.msra.mxu0 0.0
    %300 = vmatprep.subr.mxu0 0.0
    %301 = vmatpush1.xpose.msra.mxu0 0.0
    %302 = vmatprep.subr.mxu0 0.0
    %303 = vmatpush1.xpose.msra.mxu0 0.0
    %304 = vmatprep.subr.mxu0 0.0
    %305 = vmatpush1.xpose.msra.mxu0 0.0
    %306 = vmatprep.subr.mxu0 0.0
    %307 = vmatpush1.xpose.msra.mxu0 0.0
    %308 = vmatprep.subr.mxu0 0.0
    %309 = vmatpush1.xpose.msra.mxu0 0.0
    %310 = vmatprep.subr.mxu0 0.0
    %311 = vmatpush1.xpose.msra.mxu0 0.0
    %312 = vmatprep.subr.mxu0 0.0
    %313 = vmatpush1.xpose.msra.mxu0 0.0
    %314 = vmatprep.subr.mxu0 0.0
    %315 = vmatpush1.xpose.msra.mxu0 0.0
    %316 = vmatprep.subr.mxu0 0.0
    %317 = vmatpush1.xpose.msra.mxu0 0.0
    %318 = vmatprep.subr.mxu0 0.0
    %319 = vmatpush1.xpose.msra.mxu0 0.0
    %320 = vmatprep.subr.mxu0 0.0
    %321 = vmatpush1.xpose.msra.mxu0 0.0
    %322 = vmatprep.subr.mxu0 0.0
    %323 = vmatpush1.xpose.msra.mxu0 %v290
    %324 = vmatprep.subr.mxu0 0.0
    %325 = vmatpush2.xpose.msra.mxu0 0.0
    %326 = vmatprep.subr.mxu0 0.0
    %327 = vmatpush2.xpose.msra.mxu0 0.0
    %328 = vmatprep.subr.mxu0 0.0
    %329 = vmatpush2.xpose.msra.mxu0 0.0
    %330 = vmatprep.subr.mxu0 0.0
    %331 = vmatpush2.xpose.msra.mxu0 0.0
    %332 = vmatprep.subr.mxu0 0.0
    %333 = vmatpush2.xpose.msra.mxu0 0.0
    %334 = vmatprep.subr.mxu0 0.0
    %335 = vmatpush2.xpose.msra.mxu0 0.0
    %336 = vmatprep.subr.mxu0 0.0
    %337 = vmatpush2.xpose.msra.mxu0 0.0
    %338 = vmatprep.subr.mxu0 0.0
    %339 = vmatpush2.xpose.msra.mxu0 0.0
    %340 = vmatprep.subr.mxu0 0.0
    %341 = vmatpush2.xpose.msra.mxu0 0.0
    %342 = vmatprep.subr.mxu0 0.0
    %343 = vmatpush2.xpose.msra.mxu0 0.0
    %344 = vmatprep.subr.mxu0 0.0
    %345 = vmatpush2.xpose.msra.mxu0 0.0
    %346 = vmatprep.subr.mxu0 0.0
    %347 = vmatpush2.xpose.msra.mxu0 0.0
    %348 = vmatprep.subr.mxu0 0.0
    %349 = vmatpush2.xpose.msra.mxu0 0.0
    %350 = vmatprep.subr.mxu0 0.0
    %351 = vmatpush2.xpose.msra.mxu0 0.0
    %352 = vmatprep.subr.mxu0 0.0
    %353 = vmatpush2.xpose.msra.mxu0 0.0
    %354 = vmatprep.subr.mxu0 0.0
    %355 = vmatpush2.xpose.msra.mxu0 0.0
    %356 = vmatprep.mubr.f32.mxu0 0.0
    %357 = vmatmul.mubr.f32.gmra.mxu0 %v285
    %v358 = vpop.f32.mrf.mxu0
    %v359 = vadd.f32 %v280, %v358
    %v360 = vpop.f32.mrf.mxu0
    %361 = vmatprep.mubr.f32.mxu0 0.0
    %362 = vmatmul.mubr.f32.gmra.mxu0 %v288
    %v363 = vpop.f32.mrf.mxu0
    %v364 = vadd.f32 %v280, %v363
    %v365 = vpop.f32.mrf.mxu0
    %366 = vdwg.mxu0
    %vm367 = vcmask 64512
    %v368 = vsel %vm367, %v359, -inf
    %369 = vmax.xlane.f32.xlu0 %v368
    %v370 = vpop.xlane.xlu0 %369
    %v371 = vsel %vm367, %v364, -inf
    %372 = vmax.xlane.f32.xlu0 %v371
    %v373 = vpop.xlane.xlu0 %372
    %v374 = vsub.f32 %v359, %v370
    %v375 = vsub.f32 %v364, %v373
    %v376 = vmul.f32 %v374, 1.442695
    %v377 = vpow.pop %v376
    %v378 = vmul.f32 %v375, 1.442695
    %v379 = vpow.pop %v378
    %v380 = vsel %vm367, %v377, 0.0
    %381 = vadd.xlane.f32.xlu0 %v380
    %v382 = vpop.xlane.xlu0 %381
    %v383 = vsel %vm367, %v379, 0.0
    %384 = vadd.xlane.f32.xlu0 %v383
    %v385 = vpop.xlane.xlu0 %384
    %v386 = vrcp.pop %v382
    %v387 = vrcp.pop %v385
    %v388 = vmul.f32 %v377, %v386
    %v389 = vmul.f32 %v379, %v387
    %390 = vrot.lane.b32.xlu0 %v267, 64
    %v391 = vpop.permute.xlu0 %390
    %v394 = vsel %vm367, %v388, 0
    %v397 = vsel %vm367, %v389, 0
    %399 = vmatprep.subr.mxu0 0.0
    %400 = vmatpush1.msra.mxu0 0.0
    %401 = vmatprep.subr.mxu0 0.0
    %402 = vmatpush1.msra.mxu0 0.0
    %403 = vmatprep.subr.mxu0 0.0
    %404 = vmatpush1.msra.mxu0 0.0
    %405 = vmatprep.subr.mxu0 0.0
    %406 = vmatpush1.msra.mxu0 0.0
    %407 = vmatprep.subr.mxu0 0.0
    %408 = vmatpush1.msra.mxu0 0.0
    %409 = vmatprep.subr.mxu0 0.0
    %410 = vmatpush1.msra.mxu0 0.0
    %411 = vmatprep.subr.mxu0 0.0
    %412 = vmatpush1.msra.mxu0 0.0
    %413 = vmatprep.subr.mxu0 0.0
    %414 = vmatpush1.msra.mxu0 0.0
    %415 = vmatprep.subr.mxu0 0.0
    %416 = vmatpush1.msra.mxu0 0.0
    %417 = vmatprep.subr.mxu0 0.0
    %418 = vmatpush1.msra.mxu0 0.0
    %419 = vmatprep.subr.mxu0 0.0
    %420 = vmatpush1.msra.mxu0 0.0
    %421 = vmatprep.subr.mxu0 0.0
    %422 = vmatpush1.msra.mxu0 0.0
    %423 = vmatprep.subr.mxu0 0.0
    %424 = vmatpush1.msra.mxu0 0.0
    %425 = vmatprep.subr.mxu0 0.0
    %426 = vmatpush1.msra.mxu0 0.0
    %427 = vmatprep.subr.mxu0 0.0
    %428 = vmatpush1.msra.mxu0 0.0
    %429 = vmatprep.subr.mxu0 0.0
    %430 = vmatpush1.msra.mxu0 %v391
    %431 = vmatprep.subr.mxu0 0.0
    %432 = vmatpush2.msra.mxu0 0.0
    %433 = vmatprep.subr.mxu0 0.0
    %434 = vmatpush2.msra.mxu0 0.0
    %435 = vmatprep.subr.mxu0 0.0
    %436 = vmatpush2.msra.mxu0 0.0
    %437 = vmatprep.subr.mxu0 0.0
    %438 = vmatpush2.msra.mxu0 0.0
    %439 = vmatprep.subr.mxu0 0.0
    %440 = vmatpush2.msra.mxu0 0.0
    %441 = vmatprep.subr.mxu0 0.0
    %442 = vmatpush2.msra.mxu0 0.0
    %443 = vmatprep.subr.mxu0 0.0
    %444 = vmatpush2.msra.mxu0 0.0
    %445 = vmatprep.subr.mxu0 0.0
    %446 = vmatpush2.msra.mxu0 0.0
    %447 = vmatprep.subr.mxu0 0.0
    %448 = vmatpush2.msra.mxu0 0.0
    %449 = vmatprep.subr.mxu0 0.0
    %450 = vmatpush2.msra.mxu0 0.0
    %451 = vmatprep.subr.mxu0 0.0
    %452 = vmatpush2.msra.mxu0 0.0
    %453 = vmatprep.subr.mxu0 0.0
    %454 = vmatpush2.msra.mxu0 0.0
    %455 = vmatprep.subr.mxu0 0.0
    %456 = vmatpush2.msra.mxu0 0.0
    %457 = vmatprep.subr.mxu0 0.0
    %458 = vmatpush2.msra.mxu0 0.0
    %459 = vmatprep.subr.mxu0 0.0
    %460 = vmatpush2.msra.mxu0 0.0
    %461 = vmatprep.subr.mxu0 0.0
    %462 = vmatpush2.msra.mxu0 0.0
    %463 = vmatprep.mubr.f32.mxu0 0.0
    %464 = vmatmul.mubr.f32.gmra.mxu0 %v394
    %v465 = vpop.f32.mrf.mxu0
    %v466 = vadd.f32 0.0, %v465
    %v467 = vpop.f32.mrf.mxu0
    %468 = vmatprep.mubr.f32.mxu0 0.0
    %469 = vmatmul.mubr.f32.gmra.mxu0 %v397
    %v470 = vpop.f32.mrf.mxu0
    %v471 = vadd.f32 0.0, %v470
    %v472 = vpop.f32.mrf.mxu0
    %473 = vdwg.mxu0
    %v474 = vmul.f32 %v466, %v177
    %v475 = vmul.f32 %v471, %v182
    %v476 = vadd.f32 %v474, %v475
    %v477 = vmul.f32 %v272, %v177
    %v478 = vmul.f32 %v272, %v182
    %v479 = vlaneseq
    %v480 = vshrl.u32 %v479, 7
    %v481 = vsub.s32 1, %v480
    %v482 = vrot.slane %v170, %v481
    %484 = vrot.lane.b32.xlu0 %v272, 96
    %v485 = vpop.permute.xlu0 %484
    %v487 = vsel %vm126, %v477, 0
    %v490 = vsel %vm126, %v478, 0
    %v492 = vsel %vm126, %v485, 0
    %494 = vmatprep.subr.mxu0 0.0
    %495 = vmatpush1.xpose.msra.mxu0 0.0
    %496 = vmatprep.subr.mxu0 0.0
    %497 = vmatpush1.xpose.msra.mxu0 0.0
    %498 = vmatprep.subr.mxu0 0.0
    %499 = vmatpush1.xpose.msra.mxu0 0.0
    %500 = vmatprep.subr.mxu0 0.0
    %501 = vmatpush1.xpose.msra.mxu0 0.0
    %502 = vmatprep.subr.mxu0 0.0
    %503 = vmatpush1.xpose.msra.mxu0 0.0
    %504 = vmatprep.subr.mxu0 0.0
    %505 = vmatpush1.xpose.msra.mxu0 0.0
    %506 = vmatprep.subr.mxu0 0.0
    %507 = vmatpush1.xpose.msra.mxu0 0.0
    %508 = vmatprep.subr.mxu0 0.0
    %509 = vmatpush1.xpose.msra.mxu0 0.0
    %510 = vmatprep.subr.mxu0 0.0
    %511 = vmatpush1.xpose.msra.mxu0 0.0
    %512 = vmatprep.subr.mxu0 0.0
    %513 = vmatpush1.xpose.msra.mxu0 0.0
    %514 = vmatprep.subr.mxu0 0.0
    %515 = vmatpush1.xpose.msra.mxu0 0.0
    %516 = vmatprep.subr.mxu0 0.0
    %517 = vmatpush1.xpose.msra.mxu0 0.0
    %518 = vmatprep.subr.mxu0 0.0
    %519 = vmatpush1.xpose.msra.mxu0 0.0
    %520 = vmatprep.subr.mxu0 0.0
    %521 = vmatpush1.xpose.msra.mxu0 0.0
    %522 = vmatprep.subr.mxu0 0.0
    %523 = vmatpush1.xpose.msra.mxu0 0.0
    %524 = vmatprep.subr.mxu0 0.0
    %525 = vmatpush1.xpose.msra.mxu0 %v492
    %526 = vmatprep.subr.mxu0 0.0
    %527 = vmatpush2.xpose.msra.mxu0 0.0
    %528 = vmatprep.subr.mxu0 0.0
    %529 = vmatpush2.xpose.msra.mxu0 0.0
    %530 = vmatprep.subr.mxu0 0.0
    %531 = vmatpush2.xpose.msra.mxu0 0.0
    %532 = vmatprep.subr.mxu0 0.0
    %533 = vmatpush2.xpose.msra.mxu0 0.0
    %534 = vmatprep.subr.mxu0 0.0
    %535 = vmatpush2.xpose.msra.mxu0 0.0
    %536 = vmatprep.subr.mxu0 0.0
    %537 = vmatpush2.xpose.msra.mxu0 0.0
    %538 = vmatprep.subr.mxu0 0.0
    %539 = vmatpush2.xpose.msra.mxu0 0.0
    %540 = vmatprep.subr.mxu0 0.0
    %541 = vmatpush2.xpose.msra.mxu0 0.0
    %542 = vmatprep.subr.mxu0 0.0
    %543 = vmatpush2.xpose.msra.mxu0 0.0
    %544 = vmatprep.subr.mxu0 0.0
    %545 = vmatpush2.xpose.msra.mxu0 0.0
    %546 = vmatprep.subr.mxu0 0.0
    %547 = vmatpush2.xpose.msra.mxu0 0.0
    %548 = vmatprep.subr.mxu0 0.0
    %549 = vmatpush2.xpose.msra.mxu0 0.0
    %550 = vmatprep.subr.mxu0 0.0
    %551 = vmatpush2.xpose.msra.mxu0 0.0
    %552 = vmatprep.subr.mxu0 0.0
    %553 = vmatpush2.xpose.msra.mxu0 0.0
    %554 = vmatprep.subr.mxu0 0.0
    %555 = vmatpush2.xpose.msra.mxu0 0.0
    %556 = vmatprep.subr.mxu0 0.0
    %557 = vmatpush2.xpose.msra.mxu0 0.0
    %558 = vmatprep.mubr.f32.mxu0 0.0
    %559 = vmatmul.mubr.f32.gmra.mxu0 %v487
    %v560 = vpop.f32.mrf.mxu0
    %v561 = vadd.f32 %v482, %v560
    %v562 = vpop.f32.mrf.mxu0
    %563 = vmatprep.mubr.f32.mxu0 0.0
    %564 = vmatmul.mubr.f32.gmra.mxu0 %v490
    %v565 = vpop.f32.mrf.mxu0
    %v566 = vadd.f32 %v482, %v565
    %v567 = vpop.f32.mrf.mxu0
    %568 = vdwg.mxu0
    %v569 = vsel %vm367, %v561, -inf
    %570 = vmax.xlane.f32.xlu0 %v569
    %v571 = vpop.xlane.xlu0 %570
    %v572 = vsel %vm367, %v566, -inf
    %573 = vmax.xlane.f32.xlu0 %v572
    %v574 = vpop.xlane.xlu0 %573
    %v575 = vsub.f32 %v561, %v571
    %v576 = vsub.f32 %v566, %v574
    %v577 = vmul.f32 %v575, 1.442695
    %v578 = vpow.pop %v577
    %v579 = vmul.f32 %v576, 1.442695
    %v580 = vpow.pop %v579
    %v581 = vsel %vm367, %v578, 0.0
    %582 = vadd.xlane.f32.xlu0 %v581
    %v583 = vpop.xlane.xlu0 %582
    %v584 = vsel %vm367, %v580, 0.0
    %585 = vadd.xlane.f32.xlu0 %v584
    %v586 = vpop.xlane.xlu0 %585
    %v587 = vrcp.pop %v583
    %v588 = vrcp.pop %v586
    %v589 = vmul.f32 %v578, %v587
    %v590 = vmul.f32 %v580, %v588
    %591 = vrot.lane.b32.xlu0 %v272, 64
    %v592 = vpop.permute.xlu0 %591
    %v595 = vsel %vm367, %v589, 0
    %v598 = vsel %vm367, %v590, 0
    %600 = vmatprep.subr.mxu0 0.0
    %601 = vmatpush1.msra.mxu0 0.0
    %602 = vmatprep.subr.mxu0 0.0
    %603 = vmatpush1.msra.mxu0 0.0
    %604 = vmatprep.subr.mxu0 0.0
    %605 = vmatpush1.msra.mxu0 0.0
    %606 = vmatprep.subr.mxu0 0.0
    %607 = vmatpush1.msra.mxu0 0.0
    %608 = vmatprep.subr.mxu0 0.0
    %609 = vmatpush1.msra.mxu0 0.0
    %610 = vmatprep.subr.mxu0 0.0
    %611 = vmatpush1.msra.mxu0 0.0
    %612 = vmatprep.subr.mxu0 0.0
    %613 = vmatpush1.msra.mxu0 0.0
    %614 = vmatprep.subr.mxu0 0.0
    %615 = vmatpush1.msra.mxu0 0.0
    %616 = vmatprep.subr.mxu0 0.0
    %617 = vmatpush1.msra.mxu0 0.0
    %618 = vmatprep.subr.mxu0 0.0
    %619 = vmatpush1.msra.mxu0 0.0
    %620 = vmatprep.subr.mxu0 0.0
    %621 = vmatpush1.msra.mxu0 0.0
    %622 = vmatprep.subr.mxu0 0.0
    %623 = vmatpush1.msra.mxu0 0.0
    %624 = vmatprep.subr.mxu0 0.0
    %625 = vmatpush1.msra.mxu0 0.0
    %626 = vmatprep.subr.mxu0 0.0
    %627 = vmatpush1.msra.mxu0 0.0
    %628 = vmatprep.subr.mxu0 0.0
    %629 = vmatpush1.msra.mxu0 0.0
    %630 = vmatprep.subr.mxu0 0.0
    %631 = vmatpush1.msra.mxu0 %v592
    %632 = vmatprep.subr.mxu0 0.0
    %633 = vmatpush2.msra.mxu0 0.0
    %634 = vmatprep.subr.mxu0 0.0
    %635 = vmatpush2.msra.mxu0 0.0
    %636 = vmatprep.subr.mxu0 0.0
    %637 = vmatpush2.msra.mxu0 0.0
    %638 = vmatprep.subr.mxu0 0.0
    %639 = vmatpush2.msra.mxu0 0.0
    %640 = vmatprep.subr.mxu0 0.0
    %641 = vmatpush2.msra.mxu0 0.0
    %642 = vmatprep.subr.mxu0 0.0
    %643 = vmatpush2.msra.mxu0 0.0
    %644 = vmatprep.subr.mxu0 0.0
    %645 = vmatpush2.msra.mxu0 0.0
    %646 = vmatprep.subr.mxu0 0.0
    %647 = vmatpush2.msra.mxu0 0.0
    %648 = vmatprep.subr.mxu0 0.0
    %649 = vmatpush2.msra.mxu0 0.0
    %650 = vmatprep.subr.mxu0 0.0
    %651 = vmatpush2.msra.mxu0 0.0
    %652 = vmatprep.subr.mxu0 0.0
    %653 = vmatpush2.msra.mxu0 0.0
    %654 = vmatprep.subr.mxu0 0.0
    %655 = vmatpush2.msra.mxu0 0.0
    %656 = vmatprep.subr.mxu0 0.0
    %657 = vmatpush2.msra.mxu0 0.0
    %658 = vmatprep.subr.mxu0 0.0
    %659 = vmatpush2.msra.mxu0 0.0
    %660 = vmatprep.subr.mxu0 0.0
    %661 = vmatpush2.msra.mxu0 0.0
    %662 = vmatprep.subr.mxu0 0.0
    %663 = vmatpush2.msra.mxu0 0.0
    %664 = vmatprep.mubr.f32.mxu0 0.0
    %665 = vmatmul.mubr.f32.gmra.mxu0 %v595
    %v666 = vpop.f32.mrf.mxu0
    %v667 = vadd.f32 0.0, %v666
    %v668 = vpop.f32.mrf.mxu0
    %669 = vmatprep.mubr.f32.mxu0 0.0
    %670 = vmatmul.mubr.f32.gmra.mxu0 %v598
    %v671 = vpop.f32.mrf.mxu0
    %v672 = vadd.f32 0.0, %v671
    %v673 = vpop.f32.mrf.mxu0
    %674 = vdwg.mxu0
    %v675 = vmul.f32 %v667, %v177
    %v676 = vmul.f32 %v672, %v182
    %v677 = vadd.f32 %v675, %v676
    %v678 = vld [vmem:[%s6] sm:$0xff]
    %v679 = vld [vmem:[%s6 + $0x8] sm:$0xff]
    %v680 = vld [vmem:[%s6 + $0x10] sm:$0xff]
    %v681 = vld [vmem:[%s6 + $0x18] sm:$0xff]
    %v682 = vld [vmem:[%s7] sm:$0x1]
    %v684 = vlaneseq
    %v685 = vshrl.u32 %v684, 7
    %v686 = vsub.s32 0, %v685
    %v687 = vrot.slane %v682, %v686
    %v690 = vsel %vm126, %v476, 0
    %v693 = vsel %vm126, %v677, 0
    %695 = vmatprep.subr.mxu0 0.0
    %696 = vmatpush1.msra.mxu0 0.0
    %697 = vmatprep.subr.mxu0 0.0
    %698 = vmatpush1.msra.mxu0 0.0
    %699 = vmatprep.subr.mxu0 0.0
    %700 = vmatpush1.msra.mxu0 0.0
    %701 = vmatprep.subr.mxu0 0.0
    %702 = vmatpush1.msra.mxu0 0.0
    %703 = vmatprep.subr.mxu0 0.0
    %704 = vmatpush1.msra.mxu0 0.0
    %705 = vmatprep.subr.mxu0 0.0
    %706 = vmatpush1.msra.mxu0 0.0
    %707 = vmatprep.subr.mxu0 0.0
    %708 = vmatpush1.msra.mxu0 0.0
    %709 = vmatprep.subr.mxu0 0.0
    %710 = vmatpush1.msra.mxu0 0.0
    %711 = vmatprep.subr.mxu0 0.0
    %712 = vmatpush1.msra.mxu0 0.0
    %713 = vmatprep.subr.mxu0 0.0
    %714 = vmatpush1.msra.mxu0 0.0
    %715 = vmatprep.subr.mxu0 0.0
    %716 = vmatpush1.msra.mxu0 0.0
    %717 = vmatprep.subr.mxu0 0.0
    %718 = vmatpush1.msra.mxu0 0.0
    %719 = vmatprep.subr.mxu0 0.0
    %720 = vmatpush1.msra.mxu0 %v681
    %721 = vmatprep.subr.mxu0 0.0
    %722 = vmatpush1.msra.mxu0 %v680
    %723 = vmatprep.subr.mxu0 0.0
    %724 = vmatpush1.msra.mxu0 %v679
    %725 = vmatprep.subr.mxu0 0.0
    %726 = vmatpush1.msra.mxu0 %v678
    %727 = vmatprep.subr.mxu0 0.0
    %728 = vmatpush2.msra.mxu0 0.0
    %729 = vmatprep.subr.mxu0 0.0
    %730 = vmatpush2.msra.mxu0 0.0
    %731 = vmatprep.subr.mxu0 0.0
    %732 = vmatpush2.msra.mxu0 0.0
    %733 = vmatprep.subr.mxu0 0.0
    %734 = vmatpush2.msra.mxu0 0.0
    %735 = vmatprep.subr.mxu0 0.0
    %736 = vmatpush2.msra.mxu0 0.0
    %737 = vmatprep.subr.mxu0 0.0
    %738 = vmatpush2.msra.mxu0 0.0
    %739 = vmatprep.subr.mxu0 0.0
    %740 = vmatpush2.msra.mxu0 0.0
    %741 = vmatprep.subr.mxu0 0.0
    %742 = vmatpush2.msra.mxu0 0.0
    %743 = vmatprep.subr.mxu0 0.0
    %744 = vmatpush2.msra.mxu0 0.0
    %745 = vmatprep.subr.mxu0 0.0
    %746 = vmatpush2.msra.mxu0 0.0
    %747 = vmatprep.subr.mxu0 0.0
    %748 = vmatpush2.msra.mxu0 0.0
    %749 = vmatprep.subr.mxu0 0.0
    %750 = vmatpush2.msra.mxu0 0.0
    %751 = vmatprep.subr.mxu0 0.0
    %752 = vmatpush2.msra.mxu0 0.0
    %753 = vmatprep.subr.mxu0 0.0
    %754 = vmatpush2.msra.mxu0 0.0
    %755 = vmatprep.subr.mxu0 0.0
    %756 = vmatpush2.msra.mxu0 0.0
    %757 = vmatprep.subr.mxu0 0.0
    %758 = vmatpush2.msra.mxu0 0.0
    %759 = vmatprep.mubr.f32.mxu0 0.0
    %760 = vmatmul.mubr.f32.gmra.mxu0 %v690
    %v761 = vpop.f32.mrf.mxu0
    %v762 = vadd.f32 %v687, %v761
    %v763 = vpop.f32.mrf.mxu0
    %764 = vmatprep.mubr.f32.mxu0 0.0
    %765 = vmatmul.mubr.f32.gmra.mxu0 %v693
    %v766 = vpop.f32.mrf.mxu0
    %v767 = vadd.f32 %v687, %v766
    %v768 = vpop.f32.mrf.mxu0
    %769 = vdwg.mxu0
    %v770 = vadd.f32 %v762, %v168
    %v771 = vadd.f32 %v767, %v169
    %v772 = vld [vmem:[%s8] sm:$0x1]
    %v773 = vld [vmem:[%s9] sm:$0x1]
    %v774 = vsel %vm126, %v770, 0.0
    %775 = vadd.xlane.f32.xlu0 %v774
    %v776 = vpop.xlane.xlu0 %775
    %v777 = vsel %vm126, %v771, 0.0
    %778 = vadd.xlane.f32.xlu0 %v777
    %v779 = vpop.xlane.xlu0 %778
    %v780 = vmul.f32 %v776, %v133
    %v781 = vmul.f32 %v779, %v133
    %v782 = vsub.f32 %v770, %v780
    %v783 = vsub.f32 %v771, %v781
    %v784 = vmul.f32 %v782, %v782
    %v785 = vmul.f32 %v783, %v783
    %v786 = vsel %vm126, %v784, 0.0
    %787 = vadd.xlane.f32.xlu0 %v786
    %v788 = vpop.xlane.xlu0 %787
    %v789 = vsel %vm126, %v785, 0.0
    %790 = vadd.xlane.f32.xlu0 %v789
    %v791 = vpop.xlane.xlu0 %790
    %v792 = vmul.f32 %v788, %v133
    %v793 = vmul.f32 %v791, %v133
    %v794 = vadd.f32 %v792, 1e-05
    %v795 = vadd.f32 %v793, 1e-05
    %v796 = vrsqrt.pop %v794
    %v797 = vrsqrt.pop %v795
    %v798 = vmul.f32 %v782, %v796
    %v799 = vmul.f32 %v783, %v797
    %v801 = vlaneseq
    %v802 = vshrl.u32 %v801, 7
    %v803 = vsub.s32 0, %v802
    %v804 = vrot.slane %v772, %v803
    %v806 = vmul.f32 %v798, %v804
    %v807 = vmul.f32 %v799, %v804
    %v809 = vlaneseq
    %v810 = vshrl.u32 %v809, 7
    %v811 = vsub.s32 0, %v810
    %v812 = vrot.slane %v773, %v811
    %v814 = vadd.f32 %v806, %v812
    %v815 = vadd.f32 %v807, %v812
    %v816 = vld [vmem:[%s10] sm:$0xff]
    %v817 = vld [vmem:[%s10 + $0x8] sm:$0xff]
    %v818 = vld [vmem:[%s10 + $0x10] sm:$0xff]
    %v819 = vld [vmem:[%s10 + $0x18] sm:$0xff]
    %v820 = vld [vmem:[%s11] sm:$0x1]
    %v822 = vlaneseq
    %v823 = vshrl.u32 %v822, 7
    %v824 = vsub.s32 0, %v823
    %v825 = vrot.slane %v820, %v824
    %v828 = vsel %vm126, %v814, 0
    %v831 = vsel %vm126, %v815, 0
    %833 = vmatprep.subr.mxu0 0.0
    %834 = vmatpush1.msra.mxu0 0.0
    %835 = vmatprep.subr.mxu0 0.0
    %836 = vmatpush1.msra.mxu0 0.0
    %837 = vmatprep.subr.mxu0 0.0
    %838 = vmatpush1.msra.mxu0 0.0
    %839 = vmatprep.subr.mxu0 0.0
    %840 = vmatpush1.msra.mxu0 0.0
    %841 = vmatprep.subr.mxu0 0.0
    %842 = vmatpush1.msra.mxu0 0.0
    %843 = vmatprep.subr.mxu0 0.0
    %844 = vmatpush1.msra.mxu0 0.0
    %845 = vmatprep.subr.mxu0 0.0
    %846 = vmatpush1.msra.mxu0 0.0
    %847 = vmatprep.subr.mxu0 0.0
    %848 = vmatpush1.msra.mxu0 0.0
    %849 = vmatprep.subr.mxu0 0.0
    %850 = vmatpush1.msra.mxu0 0.0
    %851 = vmatprep.subr.mxu0 0.0
    %852 = vmatpush1.msra.mxu0 0.0
    %853 = vmatprep.subr.mxu0 0.0
    %854 = vmatpush1.msra.mxu0 0.0
    %855 = vmatprep.subr.mxu0 0.0
    %856 = vmatpush1.msra.mxu0 0.0
    %857 = vmatprep.subr.mxu0 0.0
    %858 = vmatpush1.msra.mxu0 %v819
    %859 = vmatprep.subr.mxu0 0.0
    %860 = vmatpush1.msra.mxu0 %v818
    %861 = vmatprep.subr.mxu0 0.0
    %862 = vmatpush1.msra.mxu0 %v817
    %863 = vmatprep.subr.mxu0 0.0
    %864 = vmatpush1.msra.mxu0 %v816
    %865 = vmatprep.subr.mxu0 0.0
    %866 = vmatpush2.msra.mxu0 0.0
    %867 = vmatprep.subr.mxu0 0.0
    %868 = vmatpush2.msra.mxu0 0.0
    %869 = vmatprep.subr.mxu0 0.0
    %870 = vmatpush2.msra.mxu0 0.0
    %871 = vmatprep.subr.mxu0 0.0
    %872 = vmatpush2.msra.mxu0 0.0
    %873 = vmatprep.subr.mxu0 0.0
    %874 = vmatpush2.msra.mxu0 0.0
    %875 = vmatprep.subr.mxu0 0.0
    %876 = vmatpush2.msra.mxu0 0.0
    %877 = vmatprep.subr.mxu0 0.0
    %878 = vmatpush2.msra.mxu0 0.0
    %879 = vmatprep.subr.mxu0 0.0
    %880 = vmatpush2.msra.mxu0 0.0
    %881 = vmatprep.subr.mxu0 0.0
    %882 = vmatpush2.msra.mxu0 0.0
    %883 = vmatprep.subr.mxu0 0.0
    %884 = vmatpush2.msra.mxu0 0.0
    %885 = vmatprep.subr.mxu0 0.0
    %886 = vmatpush2.msra.mxu0 0.0
    %887 = vmatprep.subr.mxu0 0.0
    %888 = vmatpush2.msra.mxu0 0.0
    %889 = vmatprep.subr.mxu0 0.0
    %890 = vmatpush2.msra.mxu0 0.0
    %891 = vmatprep.subr.mxu0 0.0
    %892 = vmatpush2.msra.mxu0 0.0
    %893 = vmatprep.subr.mxu0 0.0
    %894 = vmatpush2.msra.mxu0 0.0
    %895 = vmatprep.subr.mxu0 0.0
    %896 = vmatpush2.msra.mxu0 0.0
    %897 = vmatprep.mubr.f32.mxu0 0.0
    %898 = vmatmul.mubr.f32.gmra.mxu0 %v828
    %v899 = vpop.f32.mrf.mxu0
    %v900 = vadd.f32 %v825, %v899
    %v901 = vpop.f32.mrf.mxu0
    %902 = vmatprep.mubr.f32.mxu0 0.0
    %903 = vmatmul.mubr.f32.gmra.mxu0 %v831
    %v904 = vpop.f32.mrf.mxu0
    %v905 = vadd.f32 %v825, %v904
    %v906 = vpop.f32.mrf.mxu0
    %907 = vdwg.mxu0
    %v908 = vmul.f32 %v900, %v900
    %v909 = vmul.f32 %v905, %v905
    %v910 = vmul.f32 %v900, %v908
    %v911 = vmul.f32 %v905, %v909
    %v912 = vmul.f32 %v910, 0.044715
    %v913 = vmul.f32 %v911, 0.044715
    %v914 = vadd.f32 %v900, %v912
    %v915 = vadd.f32 %v905, %v913
    %v916 = vmul.f32 %v914, 0.7978846
    %v917 = vmul.f32 %v915, 0.7978846
    %v918 = vtanh.pop %v916
    %v919 = vtanh.pop %v917
    %v920 = vadd.f32 %v918, 1.0
    %v921 = vadd.f32 %v919, 1.0
    %v922 = vmul.f32 %v920, 0.5
    %v923 = vmul.f32 %v921, 0.5
    %v924 = vmul.f32 %v900, %v922
    %v925 = vmul.f32 %v905, %v923
    %v926 = vld [vmem:[%s12] sm:$0xff]
    %v927 = vld [vmem:[%s12 + $0x8] sm:$0xff]
    %v928 = vld [vmem:[%s12 + $0x10] sm:$0xff]
    %v929 = vld [vmem:[%s12 + $0x18] sm:$0xff]
    %v930 = vld [vmem:[%s12 + $0x20] sm:$0xff]
    %v931 = vld [vmem:[%s12 + $0x28] sm:$0xff]
    %v932 = vld [vmem:[%s12 + $0x30] sm:$0xff]
    %v933 = vld [vmem:[%s12 + $0x38] sm:$0xff]
    %v934 = vld [vmem:[%s13] sm:$0x1]
    %v936 = vlaneseq
    %v937 = vshrl.u32 %v936, 7
    %v938 = vsub.s32 0, %v937
    %v939 = vrot.slane %v934, %v938
    %vm941 = vcmask 523264
    %v943 = vsel %vm941, %v924, 0
    %v946 = vsel %vm941, %v925, 0
    %948 = vmatprep.subr.mxu0 0.0
    %949 = vmatpush1.msra.mxu0 0.0
    %950 = vmatprep.subr.mxu0 0.0
    %951 = vmatpush1.msra.mxu0 0.0
    %952 = vmatprep.subr.mxu0 0.0
    %953 = vmatpush1.msra.mxu0 0.0
    %954 = vmatprep.subr.mxu0 0.0
    %955 = vmatpush1.msra.mxu0 0.0
    %956 = vmatprep.subr.mxu0 0.0
    %957 = vmatpush1.msra.mxu0 0.0
    %958 = vmatprep.subr.mxu0 0.0
    %959 = vmatpush1.msra.mxu0 0.0
    %960 = vmatprep.subr.mxu0 0.0
    %961 = vmatpush1.msra.mxu0 0.0
    %962 = vmatprep.subr.mxu0 0.0
    %963 = vmatpush1.msra.mxu0 0.0
    %964 = vmatprep.subr.mxu0 0.0
    %965 = vmatpush1.msra.mxu0 %v933
    %966 = vmatprep.subr.mxu0 0.0
    %967 = vmatpush1.msra.mxu0 %v932
    %968 = vmatprep.subr.mxu0 0.0
    %969 = vmatpush1.msra.mxu0 %v931
    %970 = vmatprep.subr.mxu0 0.0
    %971 = vmatpush1.msra.mxu0 %v930
    %972 = vmatprep.subr.mxu0 0.0
    %973 = vmatpush1.msra.mxu0 %v929
    %974 = vmatprep.subr.mxu0 0.0
    %975 = vmatpush1.msra.mxu0 %v928
    %976 = vmatprep.subr.mxu0 0.0
    %977 = vmatpush1.msra.mxu0 %v927
    %978 = vmatprep.subr.mxu0 0.0
    %979 = vmatpush1.msra.mxu0 %v926
    %980 = vmatprep.subr.mxu0 0.0
    %981 = vmatpush2.msra.mxu0 0.0
    %982 = vmatprep.subr.mxu0 0.0
    %983 = vmatpush2.msra.mxu0 0.0
    %984 = vmatprep.subr.mxu0 0.0
    %985 = vmatpush2.msra.mxu0 0.0
    %986 = vmatprep.subr.mxu0 0.0
    %987 = vmatpush2.msra.mxu0 0.0
    %988 = vmatprep.subr.mxu0 0.0
    %989 = vmatpush2.msra.mxu0 0.0
    %990 = vmatprep.subr.mxu0 0.0
    %991 = vmatpush2.msra.mxu0 0.0
    %992 = vmatprep.subr.mxu0 0.0
    %993 = vmatpush2.msra.mxu0 0.0
    %994 = vmatprep.subr.mxu0 0.0
    %995 = vmatpush2.msra.mxu0 0.0
    %996 = vmatprep.subr.mxu0 0.0
    %997 = vmatpush2.msra.mxu0 0.0
    %998 = vmatprep.subr.mxu0 0.0
    %999 = vmatpush2.msra.mxu0 0.0
    %1000 = vmatprep.subr.mxu0 0.0
    %1001 = vmatpush2.msra.mxu0 0.0
    %1002 = vmatprep.subr.mxu0 0.0
    %1003 = vmatpush2.msra.mxu0 0.0
    %1004 = vmatprep.subr.mxu0 0.0
    %1005 = vmatpush2.msra.mxu0 0.0
    %1006 = vmatprep.subr.mxu0 0.0
    %1007 = vmatpush2.msra.mxu0 0.0
    %1008 = vmatprep.subr.mxu0 0.0
    %1009 = vmatpush2.msra.mxu0 0.0
    %1010 = vmatprep.subr.mxu0 0.0
    %1011 = vmatpush2.msra.mxu0 0.0
    %1012 = vmatprep.mubr.f32.mxu0 0.0
    %1013 = vmatmul.mubr.f32.gmra.mxu0 %v943
    %v1014 = vpop.f32.mrf.mxu0
    %v1015 = vadd.f32 %v939, %v1014
    %v1016 = vpop.f32.mrf.mxu0
    %1017 = vmatprep.mubr.f32.mxu0 0.0
    %1018 = vmatmul.mubr.f32.gmra.mxu0 %v946
    %v1019 = vpop.f32.mrf.mxu0
    %v1020 = vadd.f32 %v939, %v1019
    %v1021 = vpop.f32.mrf.mxu0
    %1022 = vdwg.mxu0
    %v1023 = vadd.f32 %v1015, %v814
    %v1024 = vadd.f32 %v1020, %v815
    %v1025 = vld [vmem:[%s14] sm:$0x1]
    %v1026 = vld [vmem:[%s15] sm:$0x1]
    %v1027 = vsel %vm126, %v1023, 0.0
    %1028 = vadd.xlane.f32.xlu0 %v1027
    %v1029 = vpop.xlane.xlu0 %1028
    %v1030 = vsel %vm126, %v1024, 0.0
    %1031 = vadd.xlane.f32.xlu0 %v1030
    %v1032 = vpop.xlane.xlu0 %1031
    %v1033 = vmul.f32 %v1029, %v133
    %v1034 = vmul.f32 %v1032, %v133
    %v1035 = vsub.f32 %v1023, %v1033
    %v1036 = vsub.f32 %v1024, %v1034
    %v1037 = vmul.f32 %v1035, %v1035
    %v1038 = vmul.f32 %v1036, %v1036
    %v1039 = vsel %vm126, %v1037, 0.0
    %1040 = vadd.xlane.f32.xlu0 %v1039
    %v1041 = vpop.xlane.xlu0 %1040
    %v1042 = vsel %vm126, %v1038, 0.0
    %1043 = vadd.xlane.f32.xlu0 %v1042
    %v1044 = vpop.xlane.xlu0 %1043
    %v1045 = vmul.f32 %v1041, %v133
    %v1046 = vmul.f32 %v1044, %v133
    %v1047 = vadd.f32 %v1045, 1e-05
    %v1048 = vadd.f32 %v1046, 1e-05
    %v1049 = vrsqrt.pop %v1047
    %v1050 = vrsqrt.pop %v1048
    %v1051 = vmul.f32 %v1035, %v1049
    %v1052 = vmul.f32 %v1036, %v1050
    %v1054 = vlaneseq
    %v1055 = vshrl.u32 %v1054, 7
    %v1056 = vsub.s32 0, %v1055
    %v1057 = vrot.slane %v1025, %v1056
    %v1059 = vmul.f32 %v1051, %v1057
    %v1060 = vmul.f32 %v1052, %v1057
    %v1062 = vlaneseq
    %v1063 = vshrl.u32 %v1062, 7
    %v1064 = vsub.s32 0, %v1063
    %v1065 = vrot.slane %v1026, %v1064
    %v1067 = vadd.f32 %v1059, %v1065
    %v1068 = vadd.f32 %v1060, %v1065
    %s1069 = scalar_lea.vmem %s4, 32
    %v1070 = vld [vmem:[%s1069] sm:$0xff]
    %v1071 = vld [vmem:[%s1069 + $0x8] sm:$0xff]
    %v1072 = vld [vmem:[%s1069 + $0x10] sm:$0xff]
    %v1073 = vld [vmem:[%s1069 + $0x18] sm:$0xff]
    %s1074 = scalar_lea.vmem %s5, 1
    %v1075 = vld [vmem:[%s1074] sm:$0x1]
    %v1077 = vlaneseq
    %v1078 = vshrl.u32 %v1077, 7
    %v1079 = vsub.s32 0, %v1078
    %v1080 = vrot.slane %v1075, %v1079
    %v1083 = vsel %vm126, %v1067, 0
    %v1086 = vsel %vm126, %v1068, 0
    %1088 = vmatprep.subr.mxu0 0.0
    %1089 = vmatpush1.msra.mxu0 0.0
    %1090 = vmatprep.subr.mxu0 0.0
    %1091 = vmatpush1.msra.mxu0 0.0
    %1092 = vmatprep.subr.mxu0 0.0
    %1093 = vmatpush1.msra.mxu0 0.0
    %1094 = vmatprep.subr.mxu0 0.0
    %1095 = vmatpush1.msra.mxu0 0.0
    %1096 = vmatprep.subr.mxu0 0.0
    %1097 = vmatpush1.msra.mxu0 0.0
    %1098 = vmatprep.subr.mxu0 0.0
    %1099 = vmatpush1.msra.mxu0 0.0
    %1100 = vmatprep.subr.mxu0 0.0
    %1101 = vmatpush1.msra.mxu0 0.0
    %1102 = vmatprep.subr.mxu0 0.0
    %1103 = vmatpush1.msra.mxu0 0.0
    %1104 = vmatprep.subr.mxu0 0.0
    %1105 = vmatpush1.msra.mxu0 0.0
    %1106 = vmatprep.subr.mxu0 0.0
    %1107 = vmatpush1.msra.mxu0 0.0
    %1108 = vmatprep.subr.mxu0 0.0
    %1109 = vmatpush1.msra.mxu0 0.0
    %1110 = vmatprep.subr.mxu0 0.0
    %1111 = vmatpush1.msra.mxu0 0.0
    %1112 = vmatprep.subr.mxu0 0.0
    %1113 = vmatpush1.msra.mxu0 %v1073
    %1114 = vmatprep.subr.mxu0 0.0
    %1115 = vmatpush1.msra.mxu0 %v1072
    %1116 = vmatprep.subr.mxu0 0.0
    %1117 = vmatpush1.msra.mxu0 %v1071
    %1118 = vmatprep.subr.mxu0 0.0
    %1119 = vmatpush1.msra.mxu0 %v1070
    %1120 = vmatprep.subr.mxu0 0.0
    %1121 = vmatpush2.msra.mxu0 0.0
    %1122 = vmatprep.subr.mxu0 0.0
    %1123 = vmatpush2.msra.mxu0 0.0
    %1124 = vmatprep.subr.mxu0 0.0
    %1125 = vmatpush2.msra.mxu0 0.0
    %1126 = vmatprep.subr.mxu0 0.0
    %1127 = vmatpush2.msra.mxu0 0.0
    %1128 = vmatprep.subr.mxu0 0.0
    %1129 = vmatpush2.msra.mxu0 0.0
    %1130 = vmatprep.subr.mxu0 0.0
    %1131 = vmatpush2.msra.mxu0 0.0
    %1132 = vmatprep.subr.mxu0 0.0
    %1133 = vmatpush2.msra.mxu0 0.0
    %1134 = vmatprep.subr.mxu0 0.0
    %1135 = vmatpush2.msra.mxu0 0.0
    %1136 = vmatprep.subr.mxu0 0.0
    %1137 = vmatpush2.msra.mxu0 0.0
    %1138 = vmatprep.subr.mxu0 0.0
    %1139 = vmatpush2.msra.mxu0 0.0
    %1140 = vmatprep.subr.mxu0 0.0
    %1141 = vmatpush2.msra.mxu0 0.0
    %1142 = vmatprep.subr.mxu0 0.0
    %1143 = vmatpush2.msra.mxu0 0.0
    %1144 = vmatprep.subr.mxu0 0.0
    %1145 = vmatpush2.msra.mxu0 0.0
    %1146 = vmatprep.subr.mxu0 0.0
    %1147 = vmatpush2.msra.mxu0 0.0
    %1148 = vmatprep.subr.mxu0 0.0
    %1149 = vmatpush2.msra.mxu0 0.0
    %1150 = vmatprep.subr.mxu0 0.0
    %1151 = vmatpush2.msra.mxu0 0.0
    %1152 = vmatprep.mubr.f32.mxu0 0.0
    %1153 = vmatmul.mubr.f32.gmra.mxu0 %v1083
    %v1154 = vpop.f32.mrf.mxu0
    %v1155 = vadd.f32 %v1080, %v1154
    %v1156 = vpop.f32.mrf.mxu0
    %1157 = vmatprep.mubr.f32.mxu0 0.0
    %1158 = vmatmul.mubr.f32.gmra.mxu0 %v1086
    %v1159 = vpop.f32.mrf.mxu0
    %v1160 = vadd.f32 %v1080, %v1159
    %v1161 = vpop.f32.mrf.mxu0
    %1162 = vdwg.mxu0
    %v1163 = vmul.f32 %v1155, %v177
    %v1164 = vmul.f32 %v1155, %v182
    %1166 = vrot.lane.b32.xlu0 %v1155, 96
    %v1167 = vpop.permute.xlu0 %1166
    %v1169 = vsel %vm126, %v1163, 0
    %v1172 = vsel %vm126, %v1164, 0
    %v1174 = vsel %vm126, %v1167, 0
    %1176 = vmatprep.subr.mxu0 0.0
    %1177 = vmatpush1.xpose.msra.mxu0 0.0
    %1178 = vmatprep.subr.mxu0 0.0
    %1179 = vmatpush1.xpose.msra.mxu0 0.0
    %1180 = vmatprep.subr.mxu0 0.0
    %1181 = vmatpush1.xpose.msra.mxu0 0.0
    %1182 = vmatprep.subr.mxu0 0.0
    %1183 = vmatpush1.xpose.msra.mxu0 0.0
    %1184 = vmatprep.subr.mxu0 0.0
    %1185 = vmatpush1.xpose.msra.mxu0 0.0
    %1186 = vmatprep.subr.mxu0 0.0
    %1187 = vmatpush1.xpose.msra.mxu0 0.0
    %1188 = vmatprep.subr.mxu0 0.0
    %1189 = vmatpush1.xpose.msra.mxu0 0.0
    %1190 = vmatprep.subr.mxu0 0.0
    %1191 = vmatpush1.xpose.msra.mxu0 0.0
    %1192 = vmatprep.subr.mxu0 0.0
    %1193 = vmatpush1.xpose.msra.mxu0 0.0
    %1194 = vmatprep.subr.mxu0 0.0
    %1195 = vmatpush1.xpose.msra.mxu0 0.0
    %1196 = vmatprep.subr.mxu0 0.0
    %1197 = vmatpush1.xpose.msra.mxu0 0.0
    %1198 = vmatprep.subr.mxu0 0.0
    %1199 = vmatpush1.xpose.msra.mxu0 0.0
    %1200 = vmatprep.subr.mxu0 0.0
    %1201 = vmatpush1.xpose.msra.mxu0 0.0
    %1202 = vmatprep.subr.mxu0 0.0
    %1203 = vmatpush1.xpose.msra.mxu0 0.0
    %1204 = vmatprep.subr.mxu0 0.0
    %1205 = vmatpush1.xpose.msra.mxu0 0.0
    %1206 = vmatprep.subr.mxu0 0.0
    %1207 = vmatpush1.xpose.msra.mxu0 %v1174
    %1208 = vmatprep.subr.mxu0 0.0
    %1209 = vmatpush2.xpose.msra.mxu0 0.0
    %1210 = vmatprep.subr.mxu0 0.0
    %1211 = vmatpush2.xpose.msra.mxu0 0.0
    %1212 = vmatprep.subr.mxu0 0.0
    %1213 = vmatpush2.xpose.msra.mxu0 0.0
    %1214 = vmatprep.subr.mxu0 0.0
    %1215 = vmatpush2.xpose.msra.mxu0 0.0
    %1216 = vmatprep.subr.mxu0 0.0
    %1217 = vmatpush2.xpose.msra.mxu0 0.0
    %1218 = vmatprep.subr.mxu0 0.0
    %1219 = vmatpush2.xpose.msra.mxu0 0.0
    %1220 = vmatprep.subr.mxu0 0.0
    %1221 = vmatpush2.xpose.msra.mxu0 0.0
    %1222 = vmatprep.subr.mxu0 0.0
    %1223 = vmatpush2.xpose.msra.mxu0 0.0
    %1224 = vmatprep.subr.mxu0 0.0
    %1225 = vmatpush2.xpose.msra.mxu0 0.0
    %1226 = vmatprep.subr.mxu0 0.0
    %1227 = vmatpush2.xpose.msra.mxu0 0.0
    %1228 = vmatprep.subr.mxu0 0.0
    %1229 = vmatpush2.xpose.msra.mxu0 0.0
    %1230 = vmatprep.subr.mxu0 0.0
    %1231 = vmatpush2.xpose.msra.mxu0 0.0
    %1232 = vmatprep.subr.mxu0 0.0
    %1233 = vmatpush2.xpose.msra.mxu0 0.0
    %1234 = vmatprep.subr.mxu0 0.0
    %1235 = vmatpush2.xpose.msra.mxu0 0.0
    %1236 = vmatprep.subr.mxu0 0.0
    %1237 = vmatpush2.xpose.msra.mxu0 0.0
    %1238 = vmatprep.subr.mxu0 0.0
    %1239 = vmatpush2.xpose.msra.mxu0 0.0
    %1240 = vmatprep.mubr.f32.mxu0 0.0
    %1241 = vmatmul.mubr.f32.gmra.mxu0 %v1169
    %v1242 = vpop.f32.mrf.mxu0
    %v1243 = vadd.f32 %v280, %v1242
    %v1244 = vpop.f32.mrf.mxu0
    %1245 = vmatprep.mubr.f32.mxu0 0.0
    %1246 = vmatmul.mubr.f32.gmra.mxu0 %v1172
    %v1247 = vpop.f32.mrf.mxu0
    %v1248 = vadd.f32 %v280, %v1247
    %v1249 = vpop.f32.mrf.mxu0
    %1250 = vdwg.mxu0
    %v1251 = vsel %vm367, %v1243, -inf
    %1252 = vmax.xlane.f32.xlu0 %v1251
    %v1253 = vpop.xlane.xlu0 %1252
    %v1254 = vsel %vm367, %v1248, -inf
    %1255 = vmax.xlane.f32.xlu0 %v1254
    %v1256 = vpop.xlane.xlu0 %1255
    %v1257 = vsub.f32 %v1243, %v1253
    %v1258 = vsub.f32 %v1248, %v1256
    %v1259 = vmul.f32 %v1257, 1.442695
    %v1260 = vpow.pop %v1259
    %v1261 = vmul.f32 %v1258, 1.442695
    %v1262 = vpow.pop %v1261
    %v1263 = vsel %vm367, %v1260, 0.0
    %1264 = vadd.xlane.f32.xlu0 %v1263
    %v1265 = vpop.xlane.xlu0 %1264
    %v1266 = vsel %vm367, %v1262, 0.0
    %1267 = vadd.xlane.f32.xlu0 %v1266
    %v1268 = vpop.xlane.xlu0 %1267
    %v1269 = vrcp.pop %v1265
    %v1270 = vrcp.pop %v1268
    %v1271 = vmul.f32 %v1260, %v1269
    %v1272 = vmul.f32 %v1262, %v1270
    %1273 = vrot.lane.b32.xlu0 %v1155, 64
    %v1274 = vpop.permute.xlu0 %1273
    %v1277 = vsel %vm367, %v1271, 0
    %v1280 = vsel %vm367, %v1272, 0
    %1282 = vmatprep.subr.mxu0 0.0
    %1283 = vmatpush1.msra.mxu0 0.0
    %1284 = vmatprep.subr.mxu0 0.0
    %1285 = vmatpush1.msra.mxu0 0.0
    %1286 = vmatprep.subr.mxu0 0.0
    %1287 = vmatpush1.msra.mxu0 0.0
    %1288 = vmatprep.subr.mxu0 0.0
    %1289 = vmatpush1.msra.mxu0 0.0
    %1290 = vmatprep.subr.mxu0 0.0
    %1291 = vmatpush1.msra.mxu0 0.0
    %1292 = vmatprep.subr.mxu0 0.0
    %1293 = vmatpush1.msra.mxu0 0.0
    %1294 = vmatprep.subr.mxu0 0.0
    %1295 = vmatpush1.msra.mxu0 0.0
    %1296 = vmatprep.subr.mxu0 0.0
    %1297 = vmatpush1.msra.mxu0 0.0
    %1298 = vmatprep.subr.mxu0 0.0
    %1299 = vmatpush1.msra.mxu0 0.0
    %1300 = vmatprep.subr.mxu0 0.0
    %1301 = vmatpush1.msra.mxu0 0.0
    %1302 = vmatprep.subr.mxu0 0.0
    %1303 = vmatpush1.msra.mxu0 0.0
    %1304 = vmatprep.subr.mxu0 0.0
    %1305 = vmatpush1.msra.mxu0 0.0
    %1306 = vmatprep.subr.mxu0 0.0
    %1307 = vmatpush1.msra.mxu0 0.0
    %1308 = vmatprep.subr.mxu0 0.0
    %1309 = vmatpush1.msra.mxu0 0.0
    %1310 = vmatprep.subr.mxu0 0.0
    %1311 = vmatpush1.msra.mxu0 0.0
    %1312 = vmatprep.subr.mxu0 0.0
    %1313 = vmatpush1.msra.mxu0 %v1274
    %1314 = vmatprep.subr.mxu0 0.0
    %1315 = vmatpush2.msra.mxu0 0.0
    %1316 = vmatprep.subr.mxu0 0.0
    %1317 = vmatpush2.msra.mxu0 0.0
    %1318 = vmatprep.subr.mxu0 0.0
    %1319 = vmatpush2.msra.mxu0 0.0
    %1320 = vmatprep.subr.mxu0 0.0
    %1321 = vmatpush2.msra.mxu0 0.0
    %1322 = vmatprep.subr.mxu0 0.0
    %1323 = vmatpush2.msra.mxu0 0.0
    %1324 = vmatprep.subr.mxu0 0.0
    %1325 = vmatpush2.msra.mxu0 0.0
    %1326 = vmatprep.subr.mxu0 0.0
    %1327 = vmatpush2.msra.mxu0 0.0
    %1328 = vmatprep.subr.mxu0 0.0
    %1329 = vmatpush2.msra.mxu0 0.0
    %1330 = vmatprep.subr.mxu0 0.0
    %1331 = vmatpush2.msra.mxu0 0.0
    %1332 = vmatprep.subr.mxu0 0.0
    %1333 = vmatpush2.msra.mxu0 0.0
    %1334 = vmatprep.subr.mxu0 0.0
    %1335 = vmatpush2.msra.mxu0 0.0
    %1336 = vmatprep.subr.mxu0 0.0
    %1337 = vmatpush2.msra.mxu0 0.0
    %1338 = vmatprep.subr.mxu0 0.0
    %1339 = vmatpush2.msra.mxu0 0.0
    %1340 = vmatprep.subr.mxu0 0.0
    %1341 = vmatpush2.msra.mxu0 0.0
    %1342 = vmatprep.subr.mxu0 0.0
    %1343 = vmatpush2.msra.mxu0 0.0
    %1344 = vmatprep.subr.mxu0 0.0
    %1345 = vmatpush2.msra.mxu0 0.0
    %1346 = vmatprep.mubr.f32.mxu0 0.0
    %1347 = vmatmul.mubr.f32.gmra.mxu0 %v1277
    %v1348 = vpop.f32.mrf.mxu0
    %v1349 = vadd.f32 0.0, %v1348
    %v1350 = vpop.f32.mrf.mxu0
    %1351 = vmatprep.mubr.f32.mxu0 0.0
    %1352 = vmatmul.mubr.f32.gmra.mxu0 %v1280
    %v1353 = vpop.f32.mrf.mxu0
    %v1354 = vadd.f32 0.0, %v1353
    %v1355 = vpop.f32.mrf.mxu0
    %1356 = vdwg.mxu0
    %v1357 = vmul.f32 %v1349, %v177
    %v1358 = vmul.f32 %v1354, %v182
    %v1359 = vadd.f32 %v1357, %v1358
    %v1360 = vmul.f32 %v1160, %v177
    %v1361 = vmul.f32 %v1160, %v182
    %1363 = vrot.lane.b32.xlu0 %v1160, 96
    %v1364 = vpop.permute.xlu0 %1363
    %v1366 = vsel %vm126, %v1360, 0
    %v1369 = vsel %vm126, %v1361, 0
    %v1371 = vsel %vm126, %v1364, 0
    %1373 = vmatprep.subr.mxu0 0.0
    %1374 = vmatpush1.xpose.msra.mxu0 0.0
    %1375 = vmatprep.subr.mxu0 0.0
    %1376 = vmatpush1.xpose.msra.mxu0 0.0
    %1377 = vmatprep.subr.mxu0 0.0
    %1378 = vmatpush1.xpose.msra.mxu0 0.0
    %1379 = vmatprep.subr.mxu0 0.0
    %1380 = vmatpush1.xpose.msra.mxu0 0.0
    %1381 = vmatprep.subr.mxu0 0.0
    %1382 = vmatpush1.xpose.msra.mxu0 0.0
    %1383 = vmatprep.subr.mxu0 0.0
    %1384 = vmatpush1.xpose.msra.mxu0 0.0
    %1385 = vmatprep.subr.mxu0 0.0
    %1386 = vmatpush1.xpose.msra.mxu0 0.0
    %1387 = vmatprep.subr.mxu0 0.0
    %1388 = vmatpush1.xpose.msra.mxu0 0.0
    %1389 = vmatprep.subr.mxu0 0.0
    %1390 = vmatpush1.xpose.msra.mxu0 0.0
    %1391 = vmatprep.subr.mxu0 0.0
    %1392 = vmatpush1.xpose.msra.mxu0 0.0
    %1393 = vmatprep.subr.mxu0 0.0
    %1394 = vmatpush1.xpose.msra.mxu0 0.0
    %1395 = vmatprep.subr.mxu0 0.0
    %1396 = vmatpush1.xpose.msra.mxu0 0.0
    %1397 = vmatprep.subr.mxu0 0.0
    %1398 = vmatpush1.xpose.msra.mxu0 0.0
    %1399 = vmatprep.subr.mxu0 0.0
    %1400 = vmatpush1.xpose.msra.mxu0 0.0
    %1401 = vmatprep.subr.mxu0 0.0
    %1402 = vmatpush1.xpose.msra.mxu0 0.0
    %1403 = vmatprep.subr.mxu0 0.0
    %1404 = vmatpush1.xpose.msra.mxu0 %v1371
    %1405 = vmatprep.subr.mxu0 0.0
    %1406 = vmatpush2.xpose.msra.mxu0 0.0
    %1407 = vmatprep.subr.mxu0 0.0
    %1408 = vmatpush2.xpose.msra.mxu0 0.0
    %1409 = vmatprep.subr.mxu0 0.0
    %1410 = vmatpush2.xpose.msra.mxu0 0.0
    %1411 = vmatprep.subr.mxu0 0.0
    %1412 = vmatpush2.xpose.msra.mxu0 0.0
    %1413 = vmatprep.subr.mxu0 0.0
    %1414 = vmatpush2.xpose.msra.mxu0 0.0
    %1415 = vmatprep.subr.mxu0 0.0
    %1416 = vmatpush2.xpose.msra.mxu0 0.0
    %1417 = vmatprep.subr.mxu0 0.0
    %1418 = vmatpush2.xpose.msra.mxu0 0.0
    %1419 = vmatprep.subr.mxu0 0.0
    %1420 = vmatpush2.xpose.msra.mxu0 0.0
    %1421 = vmatprep.subr.mxu0 0.0
    %1422 = vmatpush2.xpose.msra.mxu0 0.0
    %1423 = vmatprep.subr.mxu0 0.0
    %1424 = vmatpush2.xpose.msra.mxu0 0.0
    %1425 = vmatprep.subr.mxu0 0.0
    %1426 = vmatpush2.xpose.msra.mxu0 0.0
    %1427 = vmatprep.subr.mxu0 0.0
    %1428 = vmatpush2.xpose.msra.mxu0 0.0
    %1429 = vmatprep.subr.mxu0 0.0
    %1430 = vmatpush2.xpose.msra.mxu0 0.0
    %1431 = vmatprep.subr.mxu0 0.0
    %1432 = vmatpush2.xpose.msra.mxu0 0.0
    %1433 = vmatprep.subr.mxu0 0.0
    %1434 = vmatpush2.xpose.msra.mxu0 0.0
    %1435 = vmatprep.subr.mxu0 0.0
    %1436 = vmatpush2.xpose.msra.mxu0 0.0
    %1437 = vmatprep.mubr.f32.mxu0 0.0
    %1438 = vmatmul.mubr.f32.gmra.mxu0 %v1366
    %v1439 = vpop.f32.mrf.mxu0
    %v1440 = vadd.f32 %v482, %v1439
    %v1441 = vpop.f32.mrf.mxu0
    %1442 = vmatprep.mubr.f32.mxu0 0.0
    %1443 = vmatmul.mubr.f32.gmra.mxu0 %v1369
    %v1444 = vpop.f32.mrf.mxu0
    %v1445 = vadd.f32 %v482, %v1444
    %v1446 = vpop.f32.mrf.mxu0
    %1447 = vdwg.mxu0
    %v1448 = vsel %vm367, %v1440, -inf
    %1449 = vmax.xlane.f32.xlu0 %v1448
    %v1450 = vpop.xlane.xlu0 %1449
    %v1451 = vsel %vm367, %v1445, -inf
    %1452 = vmax.xlane.f32.xlu0 %v1451
    %v1453 = vpop.xlane.xlu0 %1452
    %v1454 = vsub.f32 %v1440, %v1450
    %v1455 = vsub.f32 %v1445, %v1453
    %v1456 = vmul.f32 %v1454, 1.442695
    %v1457 = vpow.pop %v1456
    %v1458 = vmul.f32 %v1455, 1.442695
    %v1459 = vpow.pop %v1458
    %v1460 = vsel %vm367, %v1457, 0.0
    %1461 = vadd.xlane.f32.xlu0 %v1460
    %v1462 = vpop.xlane.xlu0 %1461
    %v1463 = vsel %vm367, %v1459, 0.0
    %1464 = vadd.xlane.f32.xlu0 %v1463
    %v1465 = vpop.xlane.xlu0 %1464
    %v1466 = vrcp.pop %v1462
    %v1467 = vrcp.pop %v1465
    %v1468 = vmul.f32 %v1457, %v1466
    %v1469 = vmul.f32 %v1459, %v1467
    %1470 = vrot.lane.b32.xlu0 %v1160, 64
    %v1471 = vpop.permute.xlu0 %1470
    %v1474 = vsel %vm367, %v1468, 0
    %v1477 = vsel %vm367, %v1469, 0
    %1479 = vmatprep.subr.mxu0 0.0
    %1480 = vmatpush1.msra.mxu0 0.0
    %1481 = vmatprep.subr.mxu0 0.0
    %1482 = vmatpush1.msra.mxu0 0.0
    %1483 = vmatprep.subr.mxu0 0.0
    %1484 = vmatpush1.msra.mxu0 0.0
    %1485 = vmatprep.subr.mxu0 0.0
    %1486 = vmatpush1.msra.mxu0 0.0
    %1487 = vmatprep.subr.mxu0 0.0
    %1488 = vmatpush1.msra.mxu0 0.0
    %1489 = vmatprep.subr.mxu0 0.0
    %1490 = vmatpush1.msra.mxu0 0.0
    %1491 = vmatprep.subr.mxu0 0.0
    %1492 = vmatpush1.msra.mxu0 0.0
    %1493 = vmatprep.subr.mxu0 0.0
    %1494 = vmatpush1.msra.mxu0 0.0
    %1495 = vmatprep.subr.mxu0 0.0
    %1496 = vmatpush1.msra.mxu0 0.0
    %1497 = vmatprep.subr.mxu0 0.0
    %1498 = vmatpush1.msra.mxu0 0.0
    %1499 = vmatprep.subr.mxu0 0.0
    %1500 = vmatpush1.msra.mxu0 0.0
    %1501 = vmatprep.subr.mxu0 0.0
    %1502 = vmatpush1.msra.mxu0 0.0
    %1503 = vmatprep.subr.mxu0 0.0
    %1504 = vmatpush1.msra.mxu0 0.0
    %1505 = vmatprep.subr.mxu0 0.0
    %1506 = vmatpush1.msra.mxu0 0.0
    %1507 = vmatprep.subr.mxu0 0.0
    %1508 = vmatpush1.msra.mxu0 0.0
    %1509 = vmatprep.subr.mxu0 0.0
    %1510 = vmatpush1.msra.mxu0 %v1471
    %1511 = vmatprep.subr.mxu0 0.0
    %1512 = vmatpush2.msra.mxu0 0.0
    %1513 = vmatprep.subr.mxu0 0.0
    %1514 = vmatpush2.msra.mxu0 0.0
    %1515 = vmatprep.subr.mxu0 0.0
    %1516 = vmatpush2.msra.mxu0 0.0
    %1517 = vmatprep.subr.mxu0 0.0
    %1518 = vmatpush2.msra.mxu0 0.0
    %1519 = vmatprep.subr.mxu0 0.0
    %1520 = vmatpush2.msra.mxu0 0.0
    %1521 = vmatprep.subr.mxu0 0.0
    %1522 = vmatpush2.msra.mxu0 0.0
    %1523 = vmatprep.subr.mxu0 0.0
    %1524 = vmatpush2.msra.mxu0 0.0
    %1525 = vmatprep.subr.mxu0 0.0
    %1526 = vmatpush2.msra.mxu0 0.0
    %1527 = vmatprep.subr.mxu0 0.0
    %1528 = vmatpush2.msra.mxu0 0.0
    %1529 = vmatprep.subr.mxu0 0.0
    %1530 = vmatpush2.msra.mxu0 0.0
    %1531 = vmatprep.subr.mxu0 0.0
    %1532 = vmatpush2.msra.mxu0 0.0
    %1533 = vmatprep.subr.mxu0 0.0
    %1534 = vmatpush2.msra.mxu0 0.0
    %1535 = vmatprep.subr.mxu0 0.0
    %1536 = vmatpush2.msra.mxu0 0.0
    %1537 = vmatprep.subr.mxu0 0.0
    %1538 = vmatpush2.msra.mxu0 0.0
    %1539 = vmatprep.subr.mxu0 0.0
    %1540 = vmatpush2.msra.mxu0 0.0
    %1541 = vmatprep.subr.mxu0 0.0
    %1542 = vmatpush2.msra.mxu0 0.0
    %1543 = vmatprep.mubr.f32.mxu0 0.0
    %1544 = vmatmul.mubr.f32.gmra.mxu0 %v1474
    %v1545 = vpop.f32.mrf.mxu0
    %v1546 = vadd.f32 0.0, %v1545
    %v1547 = vpop.f32.mrf.mxu0
    %1548 = vmatprep.mubr.f32.mxu0 0.0
    %1549 = vmatmul.mubr.f32.gmra.mxu0 %v1477
    %v1550 = vpop.f32.mrf.mxu0
    %v1551 = vadd.f32 0.0, %v1550
    %v1552 = vpop.f32.mrf.mxu0
    %1553 = vdwg.mxu0
    %v1554 = vmul.f32 %v1546, %v177
    %v1555 = vmul.f32 %v1551, %v182
    %v1556 = vadd.f32 %v1554, %v1555
    %s1557 = scalar_lea.vmem %s6, 32
    %v1558 = vld [vmem:[%s1557] sm:$0xff]
    %v1559 = vld [vmem:[%s1557 + $0x8] sm:$0xff]
    %v1560 = vld [vmem:[%s1557 + $0x10] sm:$0xff]
    %v1561 = vld [vmem:[%s1557 + $0x18] sm:$0xff]
    %s1562 = scalar_lea.vmem %s7, 1
    %v1563 = vld [vmem:[%s1562] sm:$0x1]
    %v1565 = vlaneseq
    %v1566 = vshrl.u32 %v1565, 7
    %v1567 = vsub.s32 0, %v1566
    %v1568 = vrot.slane %v1563, %v1567
    %v1571 = vsel %vm126, %v1359, 0
    %v1574 = vsel %vm126, %v1556, 0
    %1576 = vmatprep.subr.mxu0 0.0
    %1577 = vmatpush1.msra.mxu0 0.0
    %1578 = vmatprep.subr.mxu0 0.0
    %1579 = vmatpush1.msra.mxu0 0.0
    %1580 = vmatprep.subr.mxu0 0.0
    %1581 = vmatpush1.msra.mxu0 0.0
    %1582 = vmatprep.subr.mxu0 0.0
    %1583 = vmatpush1.msra.mxu0 0.0
    %1584 = vmatprep.subr.mxu0 0.0
    %1585 = vmatpush1.msra.mxu0 0.0
    %1586 = vmatprep.subr.mxu0 0.0
    %1587 = vmatpush1.msra.mxu0 0.0
    %1588 = vmatprep.subr.mxu0 0.0
    %1589 = vmatpush1.msra.mxu0 0.0
    %1590 = vmatprep.subr.mxu0 0.0
    %1591 = vmatpush1.msra.mxu0 0.0
    %1592 = vmatprep.subr.mxu0 0.0
    %1593 = vmatpush1.msra.mxu0 0.0
    %1594 = vmatprep.subr.mxu0 0.0
    %1595 = vmatpush1.msra.mxu0 0.0
    %1596 = vmatprep.subr.mxu0 0.0
    %1597 = vmatpush1.msra.mxu0 0.0
    %1598 = vmatprep.subr.mxu0 0.0
    %1599 = vmatpush1.msra.mxu0 0.0
    %1600 = vmatprep.subr.mxu0 0.0
    %1601 = vmatpush1.msra.mxu0 %v1561
    %1602 = vmatprep.subr.mxu0 0.0
    %1603 = vmatpush1.msra.mxu0 %v1560
    %1604 = vmatprep.subr.mxu0 0.0
    %1605 = vmatpush1.msra.mxu0 %v1559
    %1606 = vmatprep.subr.mxu0 0.0
    %1607 = vmatpush1.msra.mxu0 %v1558
    %1608 = vmatprep.subr.mxu0 0.0
    %1609 = vmatpush2.msra.mxu0 0.0
    %1610 = vmatprep.subr.mxu0 0.0
    %1611 = vmatpush2.msra.mxu0 0.0
    %1612 = vmatprep.subr.mxu0 0.0
    %1613 = vmatpush2.msra.mxu0 0.0
    %1614 = vmatprep.subr.mxu0 0.0
    %1615 = vmatpush2.msra.mxu0 0.0
    %1616 = vmatprep.subr.mxu0 0.0
    %1617 = vmatpush2.msra.mxu0 0.0
    %1618 = vmatprep.subr.mxu0 0.0
    %1619 = vmatpush2.msra.mxu0 0.0
    %1620 = vmatprep.subr.mxu0 0.0
    %1621 = vmatpush2.msra.mxu0 0.0
    %1622 = vmatprep.subr.mxu0 0.0
    %1623 = vmatpush2.msra.mxu0 0.0
    %1624 = vmatprep.subr.mxu0 0.0
    %1625 = vmatpush2.msra.mxu0 0.0
    %1626 = vmatprep.subr.mxu0 0.0
    %1627 = vmatpush2.msra.mxu0 0.0
    %1628 = vmatprep.subr.mxu0 0.0
    %1629 = vmatpush2.msra.mxu0 0.0
    %1630 = vmatprep.subr.mxu0 0.0
    %1631 = vmatpush2.msra.mxu0 0.0
    %1632 = vmatprep.subr.mxu0 0.0
    %1633 = vmatpush2.msra.mxu0 0.0
    %1634 = vmatprep.subr.mxu0 0.0
    %1635 = vmatpush2.msra.mxu0 0.0
    %1636 = vmatprep.subr.mxu0 0.0
    %1637 = vmatpush2.msra.mxu0 0.0
    %1638 = vmatprep.subr.mxu0 0.0
    %1639 = vmatpush2.msra.mxu0 0.0
    %1640 = vmatprep.mubr.f32.mxu0 0.0
    %1641 = vmatmul.mubr.f32.gmra.mxu0 %v1571
    %v1642 = vpop.f32.mrf.mxu0
    %v1643 = vadd.f32 %v1568, %v1642
    %v1644 = vpop.f32.mrf.mxu0
    %1645 = vmatprep.mubr.f32.mxu0 0.0
    %1646 = vmatmul.mubr.f32.gmra.mxu0 %v1574
    %v1647 = vpop.f32.mrf.mxu0
    %v1648 = vadd.f32 %v1568, %v1647
    %v1649 = vpop.f32.mrf.mxu0
    %1650 = vdwg.mxu0
    %v1651 = vadd.f32 %v1643, %v1067
    %v1652 = vadd.f32 %v1648, %v1068
    %s1653 = scalar_lea.vmem %s8, 1
    %v1654 = vld [vmem:[%s1653] sm:$0x1]
    %s1655 = scalar_lea.vmem %s9, 1
    %v1656 = vld [vmem:[%s1655] sm:$0x1]
    %v1657 = vsel %vm126, %v1651, 0.0
    %1658 = vadd.xlane.f32.xlu0 %v1657
    %v1659 = vpop.xlane.xlu0 %1658
    %v1660 = vsel %vm126, %v1652, 0.0
    %1661 = vadd.xlane.f32.xlu0 %v1660
    %v1662 = vpop.xlane.xlu0 %1661
    %v1663 = vmul.f32 %v1659, %v133
    %v1664 = vmul.f32 %v1662, %v133
    %v1665 = vsub.f32 %v1651, %v1663
    %v1666 = vsub.f32 %v1652, %v1664
    %v1667 = vmul.f32 %v1665, %v1665
    %v1668 = vmul.f32 %v1666, %v1666
    %v1669 = vsel %vm126, %v1667, 0.0
    %1670 = vadd.xlane.f32.xlu0 %v1669
    %v1671 = vpop.xlane.xlu0 %1670
    %v1672 = vsel %vm126, %v1668, 0.0
    %1673 = vadd.xlane.f32.xlu0 %v1672
    %v1674 = vpop.xlane.xlu0 %1673
    %v1675 = vmul.f32 %v1671, %v133
    %v1676 = vmul.f32 %v1674, %v133
    %v1677 = vadd.f32 %v1675, 1e-05
    %v1678 = vadd.f32 %v1676, 1e-05
    %v1679 = vrsqrt.pop %v1677
    %v1680 = vrsqrt.pop %v1678
    %v1681 = vmul.f32 %v1665, %v1679
    %v1682 = vmul.f32 %v1666, %v1680
    %v1684 = vlaneseq
    %v1685 = vshrl.u32 %v1684, 7
    %v1686 = vsub.s32 0, %v1685
    %v1687 = vrot.slane %v1654, %v1686
    %v1689 = vmul.f32 %v1681, %v1687
    %v1690 = vmul.f32 %v1682, %v1687
    %v1692 = vlaneseq
    %v1693 = vshrl.u32 %v1692, 7
    %v1694 = vsub.s32 0, %v1693
    %v1695 = vrot.slane %v1656, %v1694
    %v1697 = vadd.f32 %v1689, %v1695
    %v1698 = vadd.f32 %v1690, %v1695
    %s1699 = scalar_lea.vmem %s10, 32
    %v1700 = vld [vmem:[%s1699] sm:$0xff]
    %v1701 = vld [vmem:[%s1699 + $0x8] sm:$0xff]
    %v1702 = vld [vmem:[%s1699 + $0x10] sm:$0xff]
    %v1703 = vld [vmem:[%s1699 + $0x18] sm:$0xff]
    %s1704 = scalar_lea.vmem %s11, 1
    %v1705 = vld [vmem:[%s1704] sm:$0x1]
    %v1707 = vlaneseq
    %v1708 = vshrl.u32 %v1707, 7
    %v1709 = vsub.s32 0, %v1708
    %v1710 = vrot.slane %v1705, %v1709
    %v1713 = vsel %vm126, %v1697, 0
    %v1716 = vsel %vm126, %v1698, 0
    %1718 = vmatprep.subr.mxu0 0.0
    %1719 = vmatpush1.msra.mxu0 0.0
    %1720 = vmatprep.subr.mxu0 0.0
    %1721 = vmatpush1.msra.mxu0 0.0
    %1722 = vmatprep.subr.mxu0 0.0
    %1723 = vmatpush1.msra.mxu0 0.0
    %1724 = vmatprep.subr.mxu0 0.0
    %1725 = vmatpush1.msra.mxu0 0.0
    %1726 = vmatprep.subr.mxu0 0.0
    %1727 = vmatpush1.msra.mxu0 0.0
    %1728 = vmatprep.subr.mxu0 0.0
    %1729 = vmatpush1.msra.mxu0 0.0
    %1730 = vmatprep.subr.mxu0 0.0
    %1731 = vmatpush1.msra.mxu0 0.0
    %1732 = vmatprep.subr.mxu0 0.0
    %1733 = vmatpush1.msra.mxu0 0.0
    %1734 = vmatprep.subr.mxu0 0.0
    %1735 = vmatpush1.msra.mxu0 0.0
    %1736 = vmatprep.subr.mxu0 0.0
    %1737 = vmatpush1.msra.mxu0 0.0
    %1738 = vmatprep.subr.mxu0 0.0
    %1739 = vmatpush1.msra.mxu0 0.0
    %1740 = vmatprep.subr.mxu0 0.0
    %1741 = vmatpush1.msra.mxu0 0.0
    %1742 = vmatprep.subr.mxu0 0.0
    %1743 = vmatpush1.msra.mxu0 %v1703
    %1744 = vmatprep.subr.mxu0 0.0
    %1745 = vmatpush1.msra.mxu0 %v1702
    %1746 = vmatprep.subr.mxu0 0.0
    %1747 = vmatpush1.msra.mxu0 %v1701
    %1748 = vmatprep.subr.mxu0 0.0
    %1749 = vmatpush1.msra.mxu0 %v1700
    %1750 = vmatprep.subr.mxu0 0.0
    %1751 = vmatpush2.msra.mxu0 0.0
    %1752 = vmatprep.subr.mxu0 0.0
    %1753 = vmatpush2.msra.mxu0 0.0
    %1754 = vmatprep.subr.mxu0 0.0
    %1755 = vmatpush2.msra.mxu0 0.0
    %1756 = vmatprep.subr.mxu0 0.0
    %1757 = vmatpush2.msra.mxu0 0.0
    %1758 = vmatprep.subr.mxu0 0.0
    %1759 = vmatpush2.msra.mxu0 0.0
    %1760 = vmatprep.subr.mxu0 0.0
    %1761 = vmatpush2.msra.mxu0 0.0
    %1762 = vmatprep.subr.mxu0 0.0
    %1763 = vmatpush2.msra.mxu0 0.0
    %1764 = vmatprep.subr.mxu0 0.0
    %1765 = vmatpush2.msra.mxu0 0.0
    %1766 = vmatprep.subr.mxu0 0.0
    %1767 = vmatpush2.msra.mxu0 0.0
    %1768 = vmatprep.subr.mxu0 0.0
    %1769 = vmatpush2.msra.mxu0 0.0
    %1770 = vmatprep.subr.mxu0 0.0
    %1771 = vmatpush2.msra.mxu0 0.0
    %1772 = vmatprep.subr.mxu0 0.0
    %1773 = vmatpush2.msra.mxu0 0.0
    %1774 = vmatprep.subr.mxu0 0.0
    %1775 = vmatpush2.msra.mxu0 0.0
    %1776 = vmatprep.subr.mxu0 0.0
    %1777 = vmatpush2.msra.mxu0 0.0
    %1778 = vmatprep.subr.mxu0 0.0
    %1779 = vmatpush2.msra.mxu0 0.0
    %1780 = vmatprep.subr.mxu0 0.0
    %1781 = vmatpush2.msra.mxu0 0.0
    %1782 = vmatprep.mubr.f32.mxu0 0.0
    %1783 = vmatmul.mubr.f32.gmra.mxu0 %v1713
    %v1784 = vpop.f32.mrf.mxu0
    %v1785 = vadd.f32 %v1710, %v1784
    %v1786 = vpop.f32.mrf.mxu0
    %1787 = vmatprep.mubr.f32.mxu0 0.0
    %1788 = vmatmul.mubr.f32.gmra.mxu0 %v1716
    %v1789 = vpop.f32.mrf.mxu0
    %v1790 = vadd.f32 %v1710, %v1789
    %v1791 = vpop.f32.mrf.mxu0
    %1792 = vdwg.mxu0
    %v1793 = vmul.f32 %v1785, %v1785
    %v1794 = vmul.f32 %v1790, %v1790
    %v1795 = vmul.f32 %v1785, %v1793
    %v1796 = vmul.f32 %v1790, %v1794
    %v1797 = vmul.f32 %v1795, 0.044715
    %v1798 = vmul.f32 %v1796, 0.044715
    %v1799 = vadd.f32 %v1785, %v1797
    %v1800 = vadd.f32 %v1790, %v1798
    %v1801 = vmul.f32 %v1799, 0.7978846
    %v1802 = vmul.f32 %v1800, 0.7978846
    %v1803 = vtanh.pop %v1801
    %v1804 = vtanh.pop %v1802
    %v1805 = vadd.f32 %v1803, 1.0
    %v1806 = vadd.f32 %v1804, 1.0
    %v1807 = vmul.f32 %v1805, 0.5
    %v1808 = vmul.f32 %v1806, 0.5
    %v1809 = vmul.f32 %v1785, %v1807
    %v1810 = vmul.f32 %v1790, %v1808
    %s1811 = scalar_lea.vmem %s12, 64
    %v1812 = vld [vmem:[%s1811] sm:$0xff]
    %v1813 = vld [vmem:[%s1811 + $0x8] sm:$0xff]
    %v1814 = vld [vmem:[%s1811 + $0x10] sm:$0xff]
    %v1815 = vld [vmem:[%s1811 + $0x18] sm:$0xff]
    %v1816 = vld [vmem:[%s1811 + $0x20] sm:$0xff]
    %v1817 = vld [vmem:[%s1811 + $0x28] sm:$0xff]
    %v1818 = vld [vmem:[%s1811 + $0x30] sm:$0xff]
    %v1819 = vld [vmem:[%s1811 + $0x38] sm:$0xff]
    %s1820 = scalar_lea.vmem %s13, 1
    %v1821 = vld [vmem:[%s1820] sm:$0x1]
    %v1823 = vlaneseq
    %v1824 = vshrl.u32 %v1823, 7
    %v1825 = vsub.s32 0, %v1824
    %v1826 = vrot.slane %v1821, %v1825
    %v1829 = vsel %vm941, %v1809, 0
    %v1832 = vsel %vm941, %v1810, 0
    %1834 = vmatprep.subr.mxu0 0.0
    %1835 = vmatpush1.msra.mxu0 0.0
    %1836 = vmatprep.subr.mxu0 0.0
    %1837 = vmatpush1.msra.mxu0 0.0
    %1838 = vmatprep.subr.mxu0 0.0
    %1839 = vmatpush1.msra.mxu0 0.0
    %1840 = vmatprep.subr.mxu0 0.0
    %1841 = vmatpush1.msra.mxu0 0.0
    %1842 = vmatprep.subr.mxu0 0.0
    %1843 = vmatpush1.msra.mxu0 0.0
    %1844 = vmatprep.subr.mxu0 0.0
    %1845 = vmatpush1.msra.mxu0 0.0
    %1846 = vmatprep.subr.mxu0 0.0
    %1847 = vmatpush1.msra.mxu0 0.0
    %1848 = vmatprep.subr.mxu0 0.0
    %1849 = vmatpush1.msra.mxu0 0.0
    %1850 = vmatprep.subr.mxu0 0.0
    %1851 = vmatpush1.msra.mxu0 %v1819
    %1852 = vmatprep.subr.mxu0 0.0
    %1853 = vmatpush1.msra.mxu0 %v1818
    %1854 = vmatprep.subr.mxu0 0.0
    %1855 = vmatpush1.msra.mxu0 %v1817
    %1856 = vmatprep.subr.mxu0 0.0
    %1857 = vmatpush1.msra.mxu0 %v1816
    %1858 = vmatprep.subr.mxu0 0.0
    %1859 = vmatpush1.msra.mxu0 %v1815
    %1860 = vmatprep.subr.mxu0 0.0
    %1861 = vmatpush1.msra.mxu0 %v1814
    %1862 = vmatprep.subr.mxu0 0.0
    %1863 = vmatpush1.msra.mxu0 %v1813
    %1864 = vmatprep.subr.mxu0 0.0
    %1865 = vmatpush1.msra.mxu0 %v1812
    %1866 = vmatprep.subr.mxu0 0.0
    %1867 = vmatpush2.msra.mxu0 0.0
    %1868 = vmatprep.subr.mxu0 0.0
    %1869 = vmatpush2.msra.mxu0 0.0
    %1870 = vmatprep.subr.mxu0 0.0
    %1871 = vmatpush2.msra.mxu0 0.0
    %1872 = vmatprep.subr.mxu0 0.0
    %1873 = vmatpush2.msra.mxu0 0.0
    %1874 = vmatprep.subr.mxu0 0.0
    %1875 = vmatpush2.msra.mxu0 0.0
    %1876 = vmatprep.subr.mxu0 0.0
    %1877 = vmatpush2.msra.mxu0 0.0
    %1878 = vmatprep.subr.mxu0 0.0
    %1879 = vmatpush2.msra.mxu0 0.0
    %1880 = vmatprep.subr.mxu0 0.0
    %1881 = vmatpush2.msra.mxu0 0.0
    %1882 = vmatprep.subr.mxu0 0.0
    %1883 = vmatpush2.msra.mxu0 0.0
    %1884 = vmatprep.subr.mxu0 0.0
    %1885 = vmatpush2.msra.mxu0 0.0
    %1886 = vmatprep.subr.mxu0 0.0
    %1887 = vmatpush2.msra.mxu0 0.0
    %1888 = vmatprep.subr.mxu0 0.0
    %1889 = vmatpush2.msra.mxu0 0.0
    %1890 = vmatprep.subr.mxu0 0.0
    %1891 = vmatpush2.msra.mxu0 0.0
    %1892 = vmatprep.subr.mxu0 0.0
    %1893 = vmatpush2.msra.mxu0 0.0
    %1894 = vmatprep.subr.mxu0 0.0
    %1895 = vmatpush2.msra.mxu0 0.0
    %1896 = vmatprep.subr.mxu0 0.0
    %1897 = vmatpush2.msra.mxu0 0.0
    %1898 = vmatprep.mubr.f32.mxu0 0.0
    %1899 = vmatmul.mubr.f32.gmra.mxu0 %v1829
    %v1900 = vpop.f32.mrf.mxu0
    %v1901 = vadd.f32 %v1826, %v1900
    %v1902 = vpop.f32.mrf.mxu0
    %1903 = vmatprep.mubr.f32.mxu0 0.0
    %1904 = vmatmul.mubr.f32.gmra.mxu0 %v1832
    %v1905 = vpop.f32.mrf.mxu0
    %v1906 = vadd.f32 %v1826, %v1905
    %v1907 = vpop.f32.mrf.mxu0
    %1908 = vdwg.mxu0
    %v1909 = vadd.f32 %v1901, %v1697
    %v1910 = vadd.f32 %v1906, %v1698
    %s1911 = scalar_lea.vmem %s14, 1
    %v1912 = vld [vmem:[%s1911] sm:$0x1]
    %s1913 = scalar_lea.vmem %s15, 1
    %v1914 = vld [vmem:[%s1913] sm:$0x1]
    %v1915 = vsel %vm126, %v1909, 0.0
    %1916 = vadd.xlane.f32.xlu0 %v1915
    %v1917 = vpop.xlane.xlu0 %1916
    %v1918 = vsel %vm126, %v1910, 0.0
    %1919 = vadd.xlane.f32.xlu0 %v1918
    %v1920 = vpop.xlane.xlu0 %1919
    %v1921 = vmul.f32 %v1917, %v133
    %v1922 = vmul.f32 %v1920, %v133
    %v1923 = vsub.f32 %v1909, %v1921
    %v1924 = vsub.f32 %v1910, %v1922
    %v1925 = vmul.f32 %v1923, %v1923
    %v1926 = vmul.f32 %v1924, %v1924
    %v1927 = vsel %vm126, %v1925, 0.0
    %1928 = vadd.xlane.f32.xlu0 %v1927
    %v1929 = vpop.xlane.xlu0 %1928
    %v1930 = vsel %vm126, %v1926, 0.0
    %1931 = vadd.xlane.f32.xlu0 %v1930
    %v1932 = vpop.xlane.xlu0 %1931
    %v1933 = vmul.f32 %v1929, %v133
    %v1934 = vmul.f32 %v1932, %v133
    %v1935 = vadd.f32 %v1933, 1e-05
    %v1936 = vadd.f32 %v1934, 1e-05
    %v1937 = vrsqrt.pop %v1935
    %v1938 = vrsqrt.pop %v1936
    %v1939 = vmul.f32 %v1923, %v1937
    %v1940 = vmul.f32 %v1924, %v1938
    %v1942 = vlaneseq
    %v1943 = vshrl.u32 %v1942, 7
    %v1944 = vsub.s32 0, %v1943
    %v1945 = vrot.slane %v1912, %v1944
    %v1947 = vmul.f32 %v1939, %v1945
    %v1948 = vmul.f32 %v1940, %v1945
    %v1950 = vlaneseq
    %v1951 = vshrl.u32 %v1950, 7
    %v1952 = vsub.s32 0, %v1951
    %v1953 = vrot.slane %v1914, %v1952
    %v1955 = vadd.f32 %v1947, %v1953
    %v1956 = vadd.f32 %v1948, %v1953
    %v1958 = vrot.slane %v1956, 7
    %vm1960 = vcmask 1040384
    %v1961 = vsel %vm1960, %v1955, %v1958
    %v1962 = vld [vmem:[#allocation10] sm:$0xff]
    %v1963 = vld [vmem:[#allocation10 + $0x8] sm:$0xff]
    %v1964 = vld [vmem:[#allocation10 + $0x10] sm:$0xff]
    %v1965 = vld [vmem:[#allocation10 + $0x18] sm:$0xff]
    %v1966 = vld [vmem:[%s17] sm:$0x1]
    %v1968 = vlaneseq
    %v1969 = vshrl.u32 %v1968, 7
    %v1970 = vsub.s32 0, %v1969
    %v1971 = vrot.slane %v1966, %v1970
    %v1974 = vsel %vm126, %v1961, 0
    %1976 = vmatprep.subr.mxu0 0.0
    %1977 = vmatpush1.msra.mxu0 0.0
    %1978 = vmatprep.subr.mxu0 0.0
    %1979 = vmatpush1.msra.mxu0 0.0
    %1980 = vmatprep.subr.mxu0 0.0
    %1981 = vmatpush1.msra.mxu0 0.0
    %1982 = vmatprep.subr.mxu0 0.0
    %1983 = vmatpush1.msra.mxu0 0.0
    %1984 = vmatprep.subr.mxu0 0.0
    %1985 = vmatpush1.msra.mxu0 0.0
    %1986 = vmatprep.subr.mxu0 0.0
    %1987 = vmatpush1.msra.mxu0 0.0
    %1988 = vmatprep.subr.mxu0 0.0
    %1989 = vmatpush1.msra.mxu0 0.0
    %1990 = vmatprep.subr.mxu0 0.0
    %1991 = vmatpush1.msra.mxu0 0.0
    %1992 = vmatprep.subr.mxu0 0.0
    %1993 = vmatpush1.msra.mxu0 0.0
    %1994 = vmatprep.subr.mxu0 0.0
    %1995 = vmatpush1.msra.mxu0 0.0
    %1996 = vmatprep.subr.mxu0 0.0
    %1997 = vmatpush1.msra.mxu0 0.0
    %1998 = vmatprep.subr.mxu0 0.0
    %1999 = vmatpush1.msra.mxu0 0.0
    %2000 = vmatprep.subr.mxu0 0.0
    %2001 = vmatpush1.msra.mxu0 %v1965
    %2002 = vmatprep.subr.mxu0 0.0
    %2003 = vmatpush1.msra.mxu0 %v1964
    %2004 = vmatprep.subr.mxu0 0.0
    %2005 = vmatpush1.msra.mxu0 %v1963
    %2006 = vmatprep.subr.mxu0 0.0
    %2007 = vmatpush1.msra.mxu0 %v1962
    %2008 = vmatprep.subr.mxu0 0.0
    %2009 = vmatpush2.msra.mxu0 0.0
    %2010 = vmatprep.subr.mxu0 0.0
    %2011 = vmatpush2.msra.mxu0 0.0
    %2012 = vmatprep.subr.mxu0 0.0
    %2013 = vmatpush2.msra.mxu0 0.0
    %2014 = vmatprep.subr.mxu0 0.0
    %2015 = vmatpush2.msra.mxu0 0.0
    %2016 = vmatprep.subr.mxu0 0.0
    %2017 = vmatpush2.msra.mxu0 0.0
    %2018 = vmatprep.subr.mxu0 0.0
    %2019 = vmatpush2.msra.mxu0 0.0
    %2020 = vmatprep.subr.mxu0 0.0
    %2021 = vmatpush2.msra.mxu0 0.0
    %2022 = vmatprep.subr.mxu0 0.0
    %2023 = vmatpush2.msra.mxu0 0.0
    %2024 = vmatprep.subr.mxu0 0.0
    %2025 = vmatpush2.msra.mxu0 0.0
    %2026 = vmatprep.subr.mxu0 0.0
    %2027 = vmatpush2.msra.mxu0 0.0
    %2028 = vmatprep.subr.mxu0 0.0
    %2029 = vmatpush2.msra.mxu0 0.0
    %2030 = vmatprep.subr.mxu0 0.0
    %2031 = vmatpush2.msra.mxu0 0.0
    %2032 = vmatprep.subr.mxu0 0.0
    %2033 = vmatpush2.msra.mxu0 0.0
    %2034 = vmatprep.subr.mxu0 0.0
    %2035 = vmatpush2.msra.mxu0 0.0
    %2036 = vmatprep.subr.mxu0 0.0
    %2037 = vmatpush2.msra.mxu0 0.0
    %2038 = vmatprep.subr.mxu0 0.0
    %2039 = vmatpush2.msra.mxu0 0.0
    %2040 = vmatprep.mubr.f32.mxu0 0.0
    %2041 = vmatmul.mubr.f32.gmra.mxu0 %v1974
    %v2042 = vpop.f32.mrf.mxu0
    %v2043 = vadd.f32 %v1971, %v2042
    %v2044 = vpop.f32.mrf.mxu0
    %2045 = vdwg.mxu0
    %v2046 = vtanh.pop %v2043
    %vm2047 = vcmask 254976
    %2048 = vst.msk [vmem:[#allocation11] sm:$0x3] %vm2047, %v2046
    // Predicated region
    $region94: #{forward_packed.1} parent=1 // pred_check
      _
    $region95: #{forward_packed.1} parent=1 // pred_check_branch
      %2050 = sbr.rel (0) target = $region97
    $region96: #{forward_packed.1} parent=1 // pred_region
      %s2052 = ssub.s32 32, 32
      %2053 = vsyncadd [#allocation4], %s2052
      %s2055 = sshll.u32 [#allocation11], 4
      %s2056 = int_to_ptr.vmem [resolvable:$true] %s2055
      %2058 = dma.vmem_to_hbm [thread:$0]  %s2056, 32, %s18, [#allocation4]
    $region97: #{forward_packed.1} parent=1 // pred_fallthru
      _
    // Predicated region
    $region98: #{forward_packed.1} parent=1 // pred_check
      _
    $region99: #{forward_packed.1} parent=1 // pred_check_branch
      %2060 = sbr.rel (0) target = $region101
    $region100: #{forward_packed.1} parent=1 // pred_region
      %2061 = dma.done [#allocation4], 32
    $region101: #{forward_packed.1} parent=1 // pred_fallthru
      _
    %2062 = vsyncpa [#allocation3], 1
    %2063 = vsyncpa [#allocation6], 1
    %2064 = vsyncpa [#allocation9], 1
    %2065 = vsyncpa [#allocation4], 1

</llo_original>
